<compile_context>
chip_gen: v7x
topology: tpu7x:2x2x1
jax: 0.10.0
libtpu: 0.0.40
codegen_flags: <defaults>
</compile_context>

<pallas_src>
import functools

import jax
import jax.numpy as jnp
from jax.experimental import pallas as pl
from jax.experimental.pallas import tpu as pltpu


def _round_up(x, m):
    return (x + m - 1) // m * m


def _choose_tiles(n):
    """Pick (padded_n, TM, TK) so both tile sizes divide padded_n and fit 64 MiB VMEM."""
    npad = _round_up(n, 128)
    if npad <= 512:
        return npad, npad, npad
    if npad <= 2048:
        npad = _round_up(npad, 512)
        return npad, 512, npad
    npad = _round_up(npad, 2048)
    return npad, 512, 2048


def _pad2d(x, rows, cols):
    return jnp.pad(x, ((0, rows - x.shape[0]), (0, cols - x.shape[1])))


# ----------------------------------------------------------------------------- kernels


def _accumulate(a_ref, hn_ref, acc_ref, deg_ref):
    """Accumulate A_tile @ Hn_tile (f32) and the per-row in-degree over the k axis."""
    k = pl.program_id(1)

    @pl.when(k == 0)
    def _():
        acc_ref[...] = jnp.zeros_like(acc_ref)
        deg_ref[...] = jnp.zeros_like(deg_ref)

    a = a_ref[...]                                                   # [TM, TK] bf16 (0/1)
    acc_ref[...] += jnp.dot(a, hn_ref[...], preferred_element_type=jnp.float32)
    deg_ref[...] += jnp.sum(a.astype(jnp.float32), axis=-1, keepdims=True)


def _sage_kernel_pre(a_ref, hn_ref, hs_ref, ws_ref, b_ref, o_ref, acc_ref, deg_ref,
                     *, apply_relu):
    """Neighbor transform already applied in the wrapper (hn = H @ W_neigh)."""
    _accumulate(a_ref, hn_ref, acc_ref, deg_ref)

    @pl.when(pl.program_id(1) == pl.num_programs(1) - 1)
    def _():
        inv = 1.0 / jnp.maximum(deg_ref[...], 1.0)
        out = (jnp.dot(hs_ref[...], ws_ref[...], preferred_element_type=jnp.float32)
               + acc_ref[...] * inv
               + b_ref[...])
        if apply_relu:
            out = jnp.maximum(out, 0.0)
        o_ref[...] = out.astype(o_ref.dtype)


def _sage_kernel_post(a_ref, hn_ref, hs_ref, ws_ref, wn_ref, b_ref, o_ref, acc_ref,
                      deg_ref, *, apply_relu):
    """Neighbor transform applied after aggregation (hn = H)."""
    _accumulate(a_ref, hn_ref, acc_ref, deg_ref)

    @pl.when(pl.program_id(1) == pl.num_programs(1) - 1)
    def _():
        inv = 1.0 / jnp.maximum(deg_ref[...], 1.0)
        agg = acc_ref[...] * inv
        out = (jnp.dot(hs_ref[...], ws_ref[...], preferred_element_type=jnp.float32)
               + jnp.dot(agg, wn_ref[...], preferred_element_type=jnp.float32)
               + b_ref[...])
        if apply_relu:
            out = jnp.maximum(out, 0.0)
        o_ref[...] = out.astype(o_ref.dtype)


# ----------------------------------------------------------------------------- wrapper


def sage_conv(adj_bf16, h, w_self, w_neigh, bias, *, apply_relu, tm, tk):
    """One SAGEConv(mean) layer on padded inputs.

    adj_bf16 : [Np, Np]      bf16 raw 0/1 adjacency (row i = in-neighbors of node i)
    h        : [Np, Fin_p]   f32 node features (feature dim padded to multiple of 128)
    w_self   : [Fin_p, Fout_p] f32    w_neigh : [Fin_p, Fout_p] f32    bias : [1, Fout_p] f32
    """
    npad, fin_p = h.shape
    fout_p = w_self.shape[1]
    grid = (npad // tm, npad // tk)

    pre_transform = fout_p < fin_p
    if pre_transform:
        # Reassociate: aggregate T = H @ W_neigh (narrower than H) -> smaller N^2 matmul.
        hn = jnp.dot(h, w_neigh).astype(jnp.bfloat16)            # [Np, Fout_p]
    else:
        hn = h.astype(jnp.bfloat16)                              # [Np, Fin_p]
    fagg = hn.shape[1]

    weight_map = lambda i, k: (0, 0)
    in_specs = [
        pl.BlockSpec((tm, tk), lambda i, k: (i, k)),             # adjacency tile
        pl.BlockSpec((tk, fagg), lambda i, k: (k, 0)),           # features to aggregate
        pl.BlockSpec((tm, fin_p), lambda i, k: (i, 0)),          # self features (row tile)
        pl.BlockSpec((fin_p, fout_p), weight_map),               # W_self
    ]
    operands = [adj_bf16, hn, h, w_self]
    if pre_transform:
        kern = functools.partial(_sage_kernel_pre, apply_relu=apply_relu)
    else:
        kern = functools.partial(_sage_kernel_post, apply_relu=apply_relu)
        in_specs.append(pl.BlockSpec((fin_p, fout_p), weight_map))   # W_neigh
        operands.append(w_neigh)
    in_specs.append(pl.BlockSpec((1, fout_p), weight_map))       # bias
    operands.append(bias)

    n_feat_mm = 1 if pre_transform else 2
    flops = 2 * npad * npad * fagg + 2 * npad * fin_p * fout_p * n_feat_mm
    bytes_accessed = (npad * npad * 2                    # adjacency stream (bf16)
                      + grid[0] * npad * fagg * 2        # hn re-streamed per row tile
                      + grid[1] * npad * fin_p * 4       # self features per k tile
                      + npad * fout_p * 4                # output
                      + fin_p * fout_p * 4 * n_feat_mm   # weights
                      + fout_p * 4)                      # bias
    cost = pl.CostEstimate(flops=flops, transcendentals=0, bytes_accessed=bytes_accessed)

    return pl.pallas_call(
        kern,
        out_shape=jax.ShapeDtypeStruct((npad, fout_p), jnp.float32),
        grid_spec=pltpu.PrefetchScalarGridSpec(
            num_scalar_prefetch=0,
            grid=grid,
            in_specs=in_specs,
            out_specs=pl.BlockSpec((tm, fout_p), lambda i, k: (i, 0)),
            scratch_shapes=[pltpu.VMEM((tm, fagg), jnp.float32),   # aggregation accumulator
                            pltpu.VMEM((tm, 1), jnp.float32)],     # in-degree accumulator
        ),
        compiler_params=pltpu.CompilerParams(
            dimension_semantics=("parallel", "arbitrary"),
            vmem_limit_bytes=48 << 20,   # fits v7x's 64 MiB; well under v5e/v6e's 128 MiB
        ),
        cost_estimate=cost,
    )(*operands)


def init_sage_params(key, in_feats, hid_feats, out_feats):
    """Deterministic parameter init (Xavier-ish), mirroring SAGEConv's fc_self/fc_neigh/bias."""
    ks = jax.random.split(key, 4)

    def xavier(k, shape):
        fan_in, fan_out = shape
        scale = jnp.sqrt(6.0 / (fan_in + fan_out))
        return jax.random.uniform(k, shape, jnp.float32, -scale, scale)

    return {
        "w_self1": xavier(ks[0], (in_feats, hid_feats)),
        "w_neigh1": xavier(ks[1], (in_feats, hid_feats)),
        "b1": jnp.zeros((1, hid_feats), jnp.float32),
        "w_self2": xavier(ks[2], (hid_feats, out_feats)),
        "w_neigh2": xavier(ks[3], (hid_feats, out_feats)),
        "b2": jnp.zeros((1, out_feats), jnp.float32),
    }


@jax.jit
def sage_forward(params, adj, inputs):
    """Full SAGE forward: conv1 -> ReLU -> conv2 (mean aggregator)."""
    n = adj.shape[0]
    in_feats = inputs.shape[1]
    hid_feats = params["w_self1"].shape[1]
    out_feats = params["w_self2"].shape[1]

    npad, tm, tk = _choose_tiles(n)
    fin_p = _round_up(in_feats, 128)
    hid_p = _round_up(hid_feats, 128)
    out_p = _round_up(out_feats, 128)

    # Raw 0/1 adjacency in bf16 (exact); the mean normalization happens inside the kernel.
    adj_p = _pad2d(adj.astype(jnp.bfloat16), npad, npad)
    x = _pad2d(inputs, npad, fin_p)

    ws1 = _pad2d(params["w_self1"], fin_p, hid_p)
    wn1 = _pad2d(params["w_neigh1"], fin_p, hid_p)
    b1 = _pad2d(params["b1"], 1, hid_p)
    ws2 = _pad2d(params["w_self2"], hid_p, out_p)
    wn2 = _pad2d(params["w_neigh2"], hid_p, out_p)
    b2 = _pad2d(params["b2"], 1, out_p)

    h = sage_conv(adj_p, x, ws1, wn1, b1, apply_relu=True, tm=tm, tk=tk)
    h = sage_conv(adj_p, h, ws2, wn2, b2, apply_relu=False, tm=tm, tk=tk)
    return h[:n, :out_feats]


def sage_reference(params, adj, inputs):
    """Pure-JAX reference (f32 throughout)."""
    deg = jnp.sum(adj, axis=1, keepdims=True)
    an = adj / jnp.maximum(deg, 1.0)
    h = inputs @ params["w_self1"] + (an @ inputs) @ params["w_neigh1"] + params["b1"]
    h = jnp.maximum(h, 0.0)
    h = h @ params["w_self2"] + (an @ h) @ params["w_neigh2"] + params["b2"]
    return h


if __name__ == "__main__":
    key = jax.random.PRNGKey(0)
    k_feat, k_adj, k_param = jax.random.split(key, 3)

    num_nodes = 128
    # in_feats > 128 so layer 1 exercises the reassociated (pre-transform) kernel path,
    # layer 2 exercises the post-transform path.
    in_feats, hid_feats, out_feats = 200, 32, 16

    # Synthetic graph: random directed edges (adj[i, j] = edge j -> i), no self-loops.
    adj = (jax.random.uniform(k_adj, (num_nodes, num_nodes)) < 0.3).astype(jnp.float32)
    adj = adj * (1.0 - jnp.eye(num_nodes, dtype=jnp.float32))

    inputs = jax.random.normal(k_feat, (num_nodes, in_feats), jnp.float32)
    params = init_sage_params(k_param, in_feats, hid_feats, out_feats)

    out = jax.block_until_ready(sage_forward(params, adj, inputs))
    ref = sage_reference(params, adj, inputs)

    assert out.shape == (num_nodes, out_feats)
    assert bool(jnp.all(jnp.isfinite(out)))
    err = float(jnp.max(jnp.abs(out - ref)))
    scale = float(jnp.max(jnp.abs(ref))) + 1e-6
    assert err < 0.05 * scale + 1e-2, f"mismatch: max_abs_err={err}, ref_scale={scale}"
    print("KERNEL_OK")
</pallas_src>

<mosaic_0001>
module attributes {stable_mosaic.version = 11 : i64} {
  func.func @_sage_kernel_pre(%arg0: i32, %arg1: i32, %arg2: memref<128x128xbf16, #tpu.memory_space<vmem>>, %arg3: memref<128x128xbf16, #tpu.memory_space<vmem>>, %arg4: memref<128x256xf32, #tpu.memory_space<vmem>>, %arg5: memref<256x128xf32, #tpu.memory_space<vmem>>, %arg6: memref<1x128xf32, #tpu.memory_space<vmem>>, %arg7: memref<128x128xf32, #tpu.memory_space<vmem>>, %arg8: memref<128x128xf32, #tpu.memory_space<vmem>>, %arg9: memref<128x1xf32, #tpu.memory_space<vmem>>) attributes {dimension_semantics = [#tpu.dimension_semantics<parallel>, #tpu.dimension_semantics<arbitrary>], iteration_bounds = array<i64: 1, 1>, scalar_prefetch = 0 : i64, scratch_operands = 2 : i64, tpu.core_type = #tpu.core_type<tc>, window_params = [{transform_indices = @transform_0, window_bounds = array<i64: 128, 128>}, {transform_indices = @transform_1, window_bounds = array<i64: 128, 128>}, {transform_indices = @transform_2, window_bounds = array<i64: 128, 256>}, {pipeline_mode = #tpu.pipeline_mode<synchronous>, transform_indices = @transform_3, window_bounds = array<i64: 256, 128>}, {pipeline_mode = #tpu.pipeline_mode<synchronous>, transform_indices = @transform_4, window_bounds = array<i64: 1, 128>}, {transform_indices = @transform_5, window_bounds = array<i64: 128, 128>}]} {
    %c0_i32 = arith.constant 0 : i32
    %0 = arith.cmpi eq, %arg1, %c0_i32 : i32
    %1 = arith.extui %0 : i1 to i32
    %c0_i32_0 = arith.constant 0 : i32
    %2 = arith.cmpi ne, %1, %c0_i32_0 : i32
    scf.if %2 {
      %cst_15 = arith.constant 0.000000e+00 : f32
      %18 = vector.broadcast %cst_15 : f32 to vector<128x128xf32>
      %c0_16 = arith.constant 0 : index
      %c0_17 = arith.constant 0 : index
      %19 = vector.load %arg8[%c0_16, %c0_17] : memref<128x128xf32, #tpu.memory_space<vmem>>, vector<128x128xf32>
      tpu.vector_store %arg8[%c0_16, %c0_17], %18 {strides = array<i32>} : memref<128x128xf32, #tpu.memory_space<vmem>>, vector<128x128xf32>,
      %cst_18 = arith.constant 0.000000e+00 : f32
      %20 = vector.broadcast %cst_18 : f32 to vector<128x1xf32>
      %c0_19 = arith.constant 0 : index
      %c0_20 = arith.constant 0 : index
      %21 = vector.load %arg9[%c0_19, %c0_20] : memref<128x1xf32, #tpu.memory_space<vmem>>, vector<128x1xf32>
      tpu.vector_store %arg9[%c0_19, %c0_20], %20 {strides = array<i32>} : memref<128x1xf32, #tpu.memory_space<vmem>>, vector<128x1xf32>,
    } else {
    }
    %c0 = arith.constant 0 : index
    %c0_1 = arith.constant 0 : index
    %3 = vector.load %arg2[%c0, %c0_1] : memref<128x128xbf16, #tpu.memory_space<vmem>>, vector<128x128xbf16>
    %c0_2 = arith.constant 0 : index
    %c0_3 = arith.constant 0 : index
    %4 = vector.load %arg8[%c0_2, %c0_3] : memref<128x128xf32, #tpu.memory_space<vmem>>, vector<128x128xf32>
    %c0_4 = arith.constant 0 : index
    %c0_5 = arith.constant 0 : index
    %5 = vector.load %arg3[%c0_4, %c0_5] : memref<128x128xbf16, #tpu.memory_space<vmem>>, vector<128x128xbf16>
    %cst = arith.constant dense<0.000000e+00> : vector<128x128xf32>
    %6 = tpu.matmul %3, %5, %cst {dimension_numbers = #tpu.dot_dimension_numbers<[1], [0], [0], [1], [0, 0, 1, 1], [], []>} : vector<128x128xbf16>, vector<128x128xbf16>, vector<128x128xf32> -> vector<128x128xf32>
    %7 = arith.addf %4, %6 : vector<128x128xf32>
    %c0_6 = arith.constant 0 : index
    %c0_7 = arith.constant 0 : index
    %8 = vector.load %arg8[%c0_6, %c0_7] : memref<128x128xf32, #tpu.memory_space<vmem>>, vector<128x128xf32>
    tpu.vector_store %arg8[%c0_6, %c0_7], %7 {strides = array<i32>} : memref<128x128xf32, #tpu.memory_space<vmem>>, vector<128x128xf32>,
    %c0_8 = arith.constant 0 : index
    %c0_9 = arith.constant 0 : index
    %9 = vector.load %arg9[%c0_8, %c0_9] : memref<128x1xf32, #tpu.memory_space<vmem>>, vector<128x1xf32>
    %10 = arith.extf %3 : vector<128x128xbf16> to vector<128x128xf32>
    %cst_10 = arith.constant dense<0.000000e+00> : vector<128xf32>
    %11 = vector.multi_reduction <add>, %10, %cst_10 [1] : vector<128x128xf32> to vector<128xf32>
    %12 = vector.shape_cast %11 : vector<128xf32> to vector<128x1xf32>
    %13 = arith.addf %9, %12 : vector<128x1xf32>
    %c0_11 = arith.constant 0 : index
    %c0_12 = arith.constant 0 : index
    %14 = vector.load %arg9[%c0_11, %c0_12] : memref<128x1xf32, #tpu.memory_space<vmem>>, vector<128x1xf32>
    tpu.vector_store %arg9[%c0_11, %c0_12], %13 {strides = array<i32>} : memref<128x1xf32, #tpu.memory_space<vmem>>, vector<128x1xf32>,
    %c0_i32_13 = arith.constant 0 : i32
    %15 = arith.cmpi eq, %arg1, %c0_i32_13 : i32
    %16 = arith.extui %15 : i1 to i32
    %c0_i32_14 = arith.constant 0 : i32
    %17 = arith.cmpi ne, %16, %c0_i32_14 : i32
    scf.if %17 {
      %c0_15 = arith.constant 0 : index
      %c0_16 = arith.constant 0 : index
      %18 = vector.load %arg9[%c0_15, %c0_16] : memref<128x1xf32, #tpu.memory_space<vmem>>, vector<128x1xf32>
      %cst_17 = arith.constant 1.000000e+00 : f32
      %19 = vector.broadcast %cst_17 : f32 to vector<128x1xf32>
      %20 = arith.maximumf %18, %19 : vector<128x1xf32>
      %cst_18 = arith.constant 1.000000e+00 : f32
      %21 = vector.broadcast %cst_18 : f32 to vector<128x1xf32>
      %22 = arith.divf %21, %20 : vector<128x1xf32>
      %c0_19 = arith.constant 0 : index
      %c0_20 = arith.constant 0 : index
      %23 = vector.load %arg4[%c0_19, %c0_20] : memref<128x256xf32, #tpu.memory_space<vmem>>, vector<128x256xf32>
      %c0_21 = arith.constant 0 : index
      %c0_22 = arith.constant 0 : index
      %24 = vector.load %arg5[%c0_21, %c0_22] : memref<256x128xf32, #tpu.memory_space<vmem>>, vector<256x128xf32>
      %cst_23 = arith.constant dense<0.000000e+00> : vector<128x128xf32>
      %25 = tpu.matmul %23, %24, %cst_23 {dimension_numbers = #tpu.dot_dimension_numbers<[1], [0], [0], [1], [0, 0, 1, 1], [], []>} : vector<128x256xf32>, vector<256x128xf32>, vector<128x128xf32> -> vector<128x128xf32>
      %c0_24 = arith.constant 0 : index
      %c0_25 = arith.constant 0 : index
      %26 = vector.load %arg8[%c0_24, %c0_25] : memref<128x128xf32, #tpu.memory_space<vmem>>, vector<128x128xf32>
      %27 = vector.broadcast %22 : vector<128x1xf32> to vector<128x128xf32>
      %28 = arith.mulf %26, %27 : vector<128x128xf32>
      %29 = arith.addf %25, %28 : vector<128x128xf32>
      %c0_26 = arith.constant 0 : index
      %c0_27 = arith.constant 0 : index
      %30 = vector.load %arg6[%c0_26, %c0_27] : memref<1x128xf32, #tpu.memory_space<vmem>>, vector<1x128xf32>
      %31 = vector.broadcast %30 : vector<1x128xf32> to vector<128x128xf32>
      %32 = arith.addf %29, %31 : vector<128x128xf32>
      %cst_28 = arith.constant 0.000000e+00 : f32
      %33 = vector.broadcast %cst_28 : f32 to vector<128x128xf32>
      %34 = arith.maximumf %32, %33 : vector<128x128xf32>
      %c0_29 = arith.constant 0 : index
      %c0_30 = arith.constant 0 : index
      %35 = vector.load %arg7[%c0_29, %c0_30] : memref<128x128xf32, #tpu.memory_space<vmem>>, vector<128x128xf32>
      tpu.vector_store %arg7[%c0_29, %c0_30], %34 {strides = array<i32>} : memref<128x128xf32, #tpu.memory_space<vmem>>, vector<128x128xf32>,
    } else {
    }
    return
  }
  func.func @transform_0(%arg0: i32, %arg1: i32) -> (i32, i32) {
    %c0_i32 = arith.constant 0 : i32
    return %arg0, %arg1 : i32, i32
  }
  func.func @transform_1(%arg0: i32, %arg1: i32) -> (i32, i32) {
    %c0_i32 = arith.constant 0 : i32
    %c0_i32_0 = arith.constant 0 : i32
    return %arg1, %c0_i32 : i32, i32
  }
  func.func @transform_2(%arg0: i32, %arg1: i32) -> (i32, i32) {
    %c0_i32 = arith.constant 0 : i32
    %c0_i32_0 = arith.constant 0 : i32
    return %arg0, %c0_i32 : i32, i32
  }
  func.func @transform_3(%arg0: i32, %arg1: i32) -> (i32, i32) {
    %c0_i32 = arith.constant 0 : i32
    %c0_i32_0 = arith.constant 0 : i32
    %c0_i32_1 = arith.constant 0 : i32
    return %c0_i32, %c0_i32_0 : i32, i32
  }
  func.func @transform_4(%arg0: i32, %arg1: i32) -> (i32, i32) {
    %c0_i32 = arith.constant 0 : i32
    %c0_i32_0 = arith.constant 0 : i32
    %c0_i32_1 = arith.constant 0 : i32
    return %c0_i32, %c0_i32_0 : i32, i32
  }
  func.func @transform_5(%arg0: i32, %arg1: i32) -> (i32, i32) {
    %c0_i32 = arith.constant 0 : i32
    %c0_i32_0 = arith.constant 0 : i32
    return %arg0, %c0_i32 : i32, i32
  }
}

module attributes {stable_mosaic.version = 11 : i64} {
  func.func @_sage_kernel_post(%arg0: i32, %arg1: i32, %arg2: memref<128x128xbf16, #tpu.memory_space<vmem>>, %arg3: memref<128x128xbf16, #tpu.memory_space<vmem>>, %arg4: memref<128x128xf32, #tpu.memory_space<vmem>>, %arg5: memref<128x128xf32, #tpu.memory_space<vmem>>, %arg6: memref<128x128xf32, #tpu.memory_space<vmem>>, %arg7: memref<1x128xf32, #tpu.memory_space<vmem>>, %arg8: memref<128x128xf32, #tpu.memory_space<vmem>>, %arg9: memref<128x128xf32, #tpu.memory_space<vmem>>, %arg10: memref<128x1xf32, #tpu.memory_space<vmem>>) attributes {dimension_semantics = [#tpu.dimension_semantics<parallel>, #tpu.dimension_semantics<arbitrary>], iteration_bounds = array<i64: 1, 1>, scalar_prefetch = 0 : i64, scratch_operands = 2 : i64, tpu.core_type = #tpu.core_type<tc>, window_params = [{transform_indices = @transform_0, window_bounds = array<i64: 128, 128>}, {transform_indices = @transform_1, window_bounds = array<i64: 128, 128>}, {transform_indices = @transform_2, window_bounds = array<i64: 128, 128>}, {pipeline_mode = #tpu.pipeline_mode<synchronous>, transform_indices = @transform_3, window_bounds = array<i64: 128, 128>}, {pipeline_mode = #tpu.pipeline_mode<synchronous>, transform_indices = @transform_4, window_bounds = array<i64: 128, 128>}, {pipeline_mode = #tpu.pipeline_mode<synchronous>, transform_indices = @transform_5, window_bounds = array<i64: 1, 128>}, {transform_indices = @transform_6, window_bounds = array<i64: 128, 128>}]} {
    %c0_i32 = arith.constant 0 : i32
    %0 = arith.cmpi eq, %arg1, %c0_i32 : i32
    %1 = arith.extui %0 : i1 to i32
    %c0_i32_0 = arith.constant 0 : i32
    %2 = arith.cmpi ne, %1, %c0_i32_0 : i32
    scf.if %2 {
      %cst_15 = arith.constant 0.000000e+00 : f32
      %18 = vector.broadcast %cst_15 : f32 to vector<128x128xf32>
      %c0_16 = arith.constant 0 : index
      %c0_17 = arith.constant 0 : index
      %19 = vector.load %arg9[%c0_16, %c0_17] : memref<128x128xf32, #tpu.memory_space<vmem>>, vector<128x128xf32>
      tpu.vector_store %arg9[%c0_16, %c0_17], %18 {strides = array<i32>} : memref<128x128xf32, #tpu.memory_space<vmem>>, vector<128x128xf32>,
      %cst_18 = arith.constant 0.000000e+00 : f32
      %20 = vector.broadcast %cst_18 : f32 to vector<128x1xf32>
      %c0_19 = arith.constant 0 : index
      %c0_20 = arith.constant 0 : index
      %21 = vector.load %arg10[%c0_19, %c0_20] : memref<128x1xf32, #tpu.memory_space<vmem>>, vector<128x1xf32>
      tpu.vector_store %arg10[%c0_19, %c0_20], %20 {strides = array<i32>} : memref<128x1xf32, #tpu.memory_space<vmem>>, vector<128x1xf32>,
    } else {
    }
    %c0 = arith.constant 0 : index
    %c0_1 = arith.constant 0 : index
    %3 = vector.load %arg2[%c0, %c0_1] : memref<128x128xbf16, #tpu.memory_space<vmem>>, vector<128x128xbf16>
    %c0_2 = arith.constant 0 : index
    %c0_3 = arith.constant 0 : index
    %4 = vector.load %arg9[%c0_2, %c0_3] : memref<128x128xf32, #tpu.memory_space<vmem>>, vector<128x128xf32>
    %c0_4 = arith.constant 0 : index
    %c0_5 = arith.constant 0 : index
    %5 = vector.load %arg3[%c0_4, %c0_5] : memref<128x128xbf16, #tpu.memory_space<vmem>>, vector<128x128xbf16>
    %cst = arith.constant dense<0.000000e+00> : vector<128x128xf32>
    %6 = tpu.matmul %3, %5, %cst {dimension_numbers = #tpu.dot_dimension_numbers<[1], [0], [0], [1], [0, 0, 1, 1], [], []>} : vector<128x128xbf16>, vector<128x128xbf16>, vector<128x128xf32> -> vector<128x128xf32>
    %7 = arith.addf %4, %6 : vector<128x128xf32>
    %c0_6 = arith.constant 0 : index
    %c0_7 = arith.constant 0 : index
    %8 = vector.load %arg9[%c0_6, %c0_7] : memref<128x128xf32, #tpu.memory_space<vmem>>, vector<128x128xf32>
    tpu.vector_store %arg9[%c0_6, %c0_7], %7 {strides = array<i32>} : memref<128x128xf32, #tpu.memory_space<vmem>>, vector<128x128xf32>,
    %c0_8 = arith.constant 0 : index
    %c0_9 = arith.constant 0 : index
    %9 = vector.load %arg10[%c0_8, %c0_9] : memref<128x1xf32, #tpu.memory_space<vmem>>, vector<128x1xf32>
    %10 = arith.extf %3 : vector<128x128xbf16> to vector<128x128xf32>
    %cst_10 = arith.constant dense<0.000000e+00> : vector<128xf32>
    %11 = vector.multi_reduction <add>, %10, %cst_10 [1] : vector<128x128xf32> to vector<128xf32>
    %12 = vector.shape_cast %11 : vector<128xf32> to vector<128x1xf32>
    %13 = arith.addf %9, %12 : vector<128x1xf32>
    %c0_11 = arith.constant 0 : index
    %c0_12 = arith.constant 0 : index
    %14 = vector.load %arg10[%c0_11, %c0_12] : memref<128x1xf32, #tpu.memory_space<vmem>>, vector<128x1xf32>
    tpu.vector_store %arg10[%c0_11, %c0_12], %13 {strides = array<i32>} : memref<128x1xf32, #tpu.memory_space<vmem>>, vector<128x1xf32>,
    %c0_i32_13 = arith.constant 0 : i32
    %15 = arith.cmpi eq, %arg1, %c0_i32_13 : i32
    %16 = arith.extui %15 : i1 to i32
    %c0_i32_14 = arith.constant 0 : i32
    %17 = arith.cmpi ne, %16, %c0_i32_14 : i32
    scf.if %17 {
      %c0_15 = arith.constant 0 : index
      %c0_16 = arith.constant 0 : index
      %18 = vector.load %arg10[%c0_15, %c0_16] : memref<128x1xf32, #tpu.memory_space<vmem>>, vector<128x1xf32>
      %cst_17 = arith.constant 1.000000e+00 : f32
      %19 = vector.broadcast %cst_17 : f32 to vector<128x1xf32>
      %20 = arith.maximumf %18, %19 : vector<128x1xf32>
      %cst_18 = arith.constant 1.000000e+00 : f32
      %21 = vector.broadcast %cst_18 : f32 to vector<128x1xf32>
      %22 = arith.divf %21, %20 : vector<128x1xf32>
      %c0_19 = arith.constant 0 : index
      %c0_20 = arith.constant 0 : index
      %23 = vector.load %arg9[%c0_19, %c0_20] : memref<128x128xf32, #tpu.memory_space<vmem>>, vector<128x128xf32>
      %24 = vector.broadcast %22 : vector<128x1xf32> to vector<128x128xf32>
      %25 = arith.mulf %23, %24 : vector<128x128xf32>
      %c0_21 = arith.constant 0 : index
      %c0_22 = arith.constant 0 : index
      %26 = vector.load %arg4[%c0_21, %c0_22] : memref<128x128xf32, #tpu.memory_space<vmem>>, vector<128x128xf32>
      %c0_23 = arith.constant 0 : index
      %c0_24 = arith.constant 0 : index
      %27 = vector.load %arg5[%c0_23, %c0_24] : memref<128x128xf32, #tpu.memory_space<vmem>>, vector<128x128xf32>
      %cst_25 = arith.constant dense<0.000000e+00> : vector<128x128xf32>
      %28 = tpu.matmul %26, %27, %cst_25 {dimension_numbers = #tpu.dot_dimension_numbers<[1], [0], [0], [1], [0, 0, 1, 1], [], []>} : vector<128x128xf32>, vector<128x128xf32>, vector<128x128xf32> -> vector<128x128xf32>
      %c0_26 = arith.constant 0 : index
      %c0_27 = arith.constant 0 : index
      %29 = vector.load %arg6[%c0_26, %c0_27] : memref<128x128xf32, #tpu.memory_space<vmem>>, vector<128x128xf32>
      %cst_28 = arith.constant dense<0.000000e+00> : vector<128x128xf32>
      %30 = tpu.matmul %25, %29, %cst_28 {dimension_numbers = #tpu.dot_dimension_numbers<[1], [0], [0], [1], [0, 0, 1, 1], [], []>} : vector<128x128xf32>, vector<128x128xf32>, vector<128x128xf32> -> vector<128x128xf32>
      %31 = arith.addf %28, %30 : vector<128x128xf32>
      %c0_29 = arith.constant 0 : index
      %c0_30 = arith.constant 0 : index
      %32 = vector.load %arg7[%c0_29, %c0_30] : memref<1x128xf32, #tpu.memory_space<vmem>>, vector<1x128xf32>
      %33 = vector.broadcast %32 : vector<1x128xf32> to vector<128x128xf32>
      %34 = arith.addf %31, %33 : vector<128x128xf32>
      %c0_31 = arith.constant 0 : index
      %c0_32 = arith.constant 0 : index
      %35 = vector.load %arg8[%c0_31, %c0_32] : memref<128x128xf32, #tpu.memory_space<vmem>>, vector<128x128xf32>
      tpu.vector_store %arg8[%c0_31, %c0_32], %34 {strides = array<i32>} : memref<128x128xf32, #tpu.memory_space<vmem>>, vector<128x128xf32>,
    } else {
    }
    return
  }
  func.func @transform_0(%arg0: i32, %arg1: i32) -> (i32, i32) {
    %c0_i32 = arith.constant 0 : i32
    return %arg0, %arg1 : i32, i32
  }
  func.func @transform_1(%arg0: i32, %arg1: i32) -> (i32, i32) {
    %c0_i32 = arith.constant 0 : i32
    %c0_i32_0 = arith.constant 0 : i32
    return %arg1, %c0_i32 : i32, i32
  }
  func.func @transform_2(%arg0: i32, %arg1: i32) -> (i32, i32) {
    %c0_i32 = arith.constant 0 : i32
    %c0_i32_0 = arith.constant 0 : i32
    return %arg0, %c0_i32 : i32, i32
  }
  func.func @transform_3(%arg0: i32, %arg1: i32) -> (i32, i32) {
    %c0_i32 = arith.constant 0 : i32
    %c0_i32_0 = arith.constant 0 : i32
    %c0_i32_1 = arith.constant 0 : i32
    return %c0_i32, %c0_i32_0 : i32, i32
  }
  func.func @transform_4(%arg0: i32, %arg1: i32) -> (i32, i32) {
    %c0_i32 = arith.constant 0 : i32
    %c0_i32_0 = arith.constant 0 : i32
    %c0_i32_1 = arith.constant 0 : i32
    return %c0_i32, %c0_i32_0 : i32, i32
  }
  func.func @transform_5(%arg0: i32, %arg1: i32) -> (i32, i32) {
    %c0_i32 = arith.constant 0 : i32
    %c0_i32_0 = arith.constant 0 : i32
    %c0_i32_1 = arith.constant 0 : i32
    return %c0_i32, %c0_i32_0 : i32, i32
  }
  func.func @transform_6(%arg0: i32, %arg1: i32) -> (i32, i32) {
    %c0_i32 = arith.constant 0 : i32
    %c0_i32_0 = arith.constant 0 : i32
    return %arg0, %c0_i32 : i32, i32
  }
}

</mosaic_0001>

<llo_original>
// kernel: sage_forward.3
$region0: #{sage_forward.3}
  #allocation0 [shape = 'u32[]', space=smem, size = 0x4, offset = 0x4, fixed_abs, tag = 'smem constant byte address 0x4 - core index']
  #allocation1 [shape = 'u32[144,128]{1,0:T(1,128)}', space=vmem, size = 0x12000, scoped, tag = 'internal scratch']
  #allocation2 [shape = 'f32[128,128]{1,0:T(8,128)}', space=vmem, size = 0x10000, scoped, tag = 'scratch operand']
  #allocation3 [shape = 'f32[128,1]{1,0:T(8,128)}', space=vmem, size = 0x10000, scoped, tag = 'scratch operand']
  %s0 = inlined_call_operand.vmem [shape: bf16[128,128], index: 0, kind: input, shape index: {}]
  %s1 = inlined_call_operand.vmem [shape: bf16[128,128], index: 1, kind: input, shape index: {}]
  %s2 = inlined_call_operand.vmem [shape: f32[128,128], index: 2, kind: input, shape index: {}]
  %s3 = inlined_call_operand.vmem [shape: f32[128,128], index: 3, kind: input, shape index: {}]
  %s4 = inlined_call_operand.vmem [shape: f32[128,128], index: 4, kind: input, shape index: {}]
  %s5 = inlined_call_operand.vmem [shape: f32[1,128], index: 5, kind: input, shape index: {}]
  %s6 = inlined_call_operand.vmem [shape: f32[128,128], index: 6, kind: output, shape index: {}]
  %s7 = sld [smem:[#allocation0]]
  $region42: #{sage_forward.3} parent=0
    _
  %s9 = ssub.s32 1, %s7
  %s10 = scalar_select 0, %s9, %s7
  // Predicated region
  $region2: #{sage_forward.3} parent=0 // pred_check
    _
  $region3: #{sage_forward.3} parent=0 // pred_check_branch
    %12 = sbr.rel (0) target = $region5
  $region4: #{sage_forward.3} parent=0 // pred_region
    _
  $region5: #{sage_forward.3} parent=0 // pred_fallthru
    _
  // Predicated region
  $region6: #{sage_forward.3} parent=0 // pred_check
    _
  $region7: #{sage_forward.3} parent=0 // pred_check_branch
    %14 = sbr.rel (0) target = $region9
  $region8: #{sage_forward.3} parent=0 // pred_region
    _
  $region9: #{sage_forward.3} parent=0 // pred_fallthru
    _
  // Predicated region
  $region10: #{sage_forward.3} parent=0 // pred_check
    _
  $region11: #{sage_forward.3} parent=0 // pred_check_branch
    %16 = sbr.rel (0) target = $region13
  $region12: #{sage_forward.3} parent=0 // pred_region
    _
  $region13: #{sage_forward.3} parent=0 // pred_fallthru
    _
  // Predicated region
  $region14: #{sage_forward.3} parent=0 // pred_check
    _
  $region15: #{sage_forward.3} parent=0 // pred_check_branch
    %18 = sbr.rel (0) target = $region17
  $region16: #{sage_forward.3} parent=0 // pred_region
    _
  $region17: #{sage_forward.3} parent=0 // pred_fallthru
    _
  // Predicated region
  $region18: #{sage_forward.3} parent=0 // pred_check
    _
  $region19: #{sage_forward.3} parent=0 // pred_check_branch
    %20 = sbr.rel (0) target = $region21
  $region20: #{sage_forward.3} parent=0 // pred_region
    _
  $region21: #{sage_forward.3} parent=0 // pred_fallthru
    _
  // Predicated region
  $region22: #{sage_forward.3} parent=0 // pred_check
    _
  $region23: #{sage_forward.3} parent=0 // pred_check_branch
    %22 = sbr.rel (0) target = $region25
  $region24: #{sage_forward.3} parent=0 // pred_region
    _
  $region25: #{sage_forward.3} parent=0 // pred_fallthru
    _
  %p24 = scmp.eq.s32.totalorder 0, 0
  // Predicated region
  $region26: #{sage_forward.3} parent=0 // pred_check
    %p25 = pneg %p24
  $region27: #{sage_forward.3} parent=0 // pred_check_branch
    %27 = sbr.rel (%p25) target = $region29
  $region28: #{sage_forward.3} parent=0 // pred_region
    %28 = vst [vmem:[#allocation2] sm:$0xff] 0.0
    %29 = vst [vmem:[#allocation2 + $0x8] sm:$0xff] 0.0
    %30 = vst [vmem:[#allocation2 + $0x10] sm:$0xff] 0.0
    %31 = vst [vmem:[#allocation2 + $0x18] sm:$0xff] 0.0
    %32 = vst [vmem:[#allocation2 + $0x20] sm:$0xff] 0.0
    %33 = vst [vmem:[#allocation2 + $0x28] sm:$0xff] 0.0
    %34 = vst [vmem:[#allocation2 + $0x30] sm:$0xff] 0.0
    %35 = vst [vmem:[#allocation2 + $0x38] sm:$0xff] 0.0
    %36 = vst [vmem:[#allocation2 + $0x40] sm:$0xff] 0.0
    %37 = vst [vmem:[#allocation2 + $0x48] sm:$0xff] 0.0
    %38 = vst [vmem:[#allocation2 + $0x50] sm:$0xff] 0.0
    %39 = vst [vmem:[#allocation2 + $0x58] sm:$0xff] 0.0
    %40 = vst [vmem:[#allocation2 + $0x60] sm:$0xff] 0.0
    %41 = vst [vmem:[#allocation2 + $0x68] sm:$0xff] 0.0
    %42 = vst [vmem:[#allocation2 + $0x70] sm:$0xff] 0.0
    %43 = vst [vmem:[#allocation2 + $0x78] sm:$0xff] 0.0
    %vm44 = vcmask 7168
    %45 = vst.msk [vmem:[#allocation3] sm:$0xff] %vm44, 0.0
    %46 = vst.msk [vmem:[#allocation3 + $0x8] sm:$0xff] %vm44, 0.0
    %47 = vst.msk [vmem:[#allocation3 + $0x10] sm:$0xff] %vm44, 0.0
    %48 = vst.msk [vmem:[#allocation3 + $0x18] sm:$0xff] %vm44, 0.0
    %49 = vst.msk [vmem:[#allocation3 + $0x20] sm:$0xff] %vm44, 0.0
    %50 = vst.msk [vmem:[#allocation3 + $0x28] sm:$0xff] %vm44, 0.0
    %51 = vst.msk [vmem:[#allocation3 + $0x30] sm:$0xff] %vm44, 0.0
    %52 = vst.msk [vmem:[#allocation3 + $0x38] sm:$0xff] %vm44, 0.0
    %53 = vst.msk [vmem:[#allocation3 + $0x40] sm:$0xff] %vm44, 0.0
    %54 = vst.msk [vmem:[#allocation3 + $0x48] sm:$0xff] %vm44, 0.0
    %55 = vst.msk [vmem:[#allocation3 + $0x50] sm:$0xff] %vm44, 0.0
    %56 = vst.msk [vmem:[#allocation3 + $0x58] sm:$0xff] %vm44, 0.0
    %57 = vst.msk [vmem:[#allocation3 + $0x60] sm:$0xff] %vm44, 0.0
    %58 = vst.msk [vmem:[#allocation3 + $0x68] sm:$0xff] %vm44, 0.0
    %59 = vst.msk [vmem:[#allocation3 + $0x70] sm:$0xff] %vm44, 0.0
    %60 = vst.msk [vmem:[#allocation3 + $0x78] sm:$0xff] %vm44, 0.0
  $region29: #{sage_forward.3} parent=0 // pred_fallthru
    _
  %v61 = vld [vmem:[%s0] sm:$0xf]
  %v62 = vld [vmem:[%s0 + $0x4] sm:$0xf]
  %v63 = vld [vmem:[%s0 + $0x8] sm:$0xf]
  %v64 = vld [vmem:[%s0 + $0xc] sm:$0xf]
  %v65 = vld [vmem:[%s0 + $0x10] sm:$0xf]
  %v66 = vld [vmem:[%s0 + $0x14] sm:$0xf]
  %v67 = vld [vmem:[%s0 + $0x18] sm:$0xf]
  %v68 = vld [vmem:[%s0 + $0x1c] sm:$0xf]
  %v69 = vld [vmem:[%s0 + $0x20] sm:$0xf]
  %v70 = vld [vmem:[%s0 + $0x24] sm:$0xf]
  %v71 = vld [vmem:[%s0 + $0x28] sm:$0xf]
  %v72 = vld [vmem:[%s0 + $0x2c] sm:$0xf]
  %v73 = vld [vmem:[%s0 + $0x30] sm:$0xf]
  %v74 = vld [vmem:[%s0 + $0x34] sm:$0xf]
  %v75 = vld [vmem:[%s0 + $0x38] sm:$0xf]
  %v76 = vld [vmem:[%s0 + $0x3c] sm:$0xf]
  %v77 = vld [vmem:[#allocation2] sm:$0xff]
  %v78 = vld [vmem:[#allocation2 + $0x8] sm:$0xff]
  %v79 = vld [vmem:[#allocation2 + $0x10] sm:$0xff]
  %v80 = vld [vmem:[#allocation2 + $0x18] sm:$0xff]
  %v81 = vld [vmem:[#allocation2 + $0x20] sm:$0xff]
  %v82 = vld [vmem:[#allocation2 + $0x28] sm:$0xff]
  %v83 = vld [vmem:[#allocation2 + $0x30] sm:$0xff]
  %v84 = vld [vmem:[#allocation2 + $0x38] sm:$0xff]
  %v85 = vld [vmem:[#allocation2 + $0x40] sm:$0xff]
  %v86 = vld [vmem:[#allocation2 + $0x48] sm:$0xff]
  %v87 = vld [vmem:[#allocation2 + $0x50] sm:$0xff]
  %v88 = vld [vmem:[#allocation2 + $0x58] sm:$0xff]
  %v89 = vld [vmem:[#allocation2 + $0x60] sm:$0xff]
  %v90 = vld [vmem:[#allocation2 + $0x68] sm:$0xff]
  %v91 = vld [vmem:[#allocation2 + $0x70] sm:$0xff]
  %v92 = vld [vmem:[#allocation2 + $0x78] sm:$0xff]
  %v93 = vld [vmem:[%s1] sm:$0xf]
  %v94 = vld [vmem:[%s1 + $0x4] sm:$0xf]
  %v95 = vld [vmem:[%s1 + $0x8] sm:$0xf]
  %v96 = vld [vmem:[%s1 + $0xc] sm:$0xf]
  %v97 = vld [vmem:[%s1 + $0x10] sm:$0xf]
  %v98 = vld [vmem:[%s1 + $0x14] sm:$0xf]
  %v99 = vld [vmem:[%s1 + $0x18] sm:$0xf]
  %v100 = vld [vmem:[%s1 + $0x1c] sm:$0xf]
  %v101 = vld [vmem:[%s1 + $0x20] sm:$0xf]
  %v102 = vld [vmem:[%s1 + $0x24] sm:$0xf]
  %v103 = vld [vmem:[%s1 + $0x28] sm:$0xf]
  %v104 = vld [vmem:[%s1 + $0x2c] sm:$0xf]
  %v105 = vld [vmem:[%s1 + $0x30] sm:$0xf]
  %v106 = vld [vmem:[%s1 + $0x34] sm:$0xf]
  %v107 = vld [vmem:[%s1 + $0x38] sm:$0xf]
  %v108 = vld [vmem:[%s1 + $0x3c] sm:$0xf]
  %v125 = vunpack.c.l.b16 %v61
  %v126 = vunpack.c.l.b16 %v62
  %v127 = vunpack.c.l.b16 %v63
  %v128 = vunpack.c.l.b16 %v64
  %v129 = vunpack.c.l.b16 %v65
  %v130 = vunpack.c.l.b16 %v66
  %v131 = vunpack.c.l.b16 %v67
  %v132 = vunpack.c.l.b16 %v68
  %v133 = vunpack.c.l.b16 %v69
  %v134 = vunpack.c.l.b16 %v70
  %v135 = vunpack.c.l.b16 %v71
  %v136 = vunpack.c.l.b16 %v72
  %v137 = vunpack.c.l.b16 %v73
  %v138 = vunpack.c.l.b16 %v74
  %v139 = vunpack.c.l.b16 %v75
  %v140 = vunpack.c.l.b16 %v76
  %v141 = vpack.c.b16 %v126, %v125
  %v142 = vpack.c.b16 %v128, %v127
  %v143 = vpack.c.b16 %v130, %v129
  %v144 = vpack.c.b16 %v132, %v131
  %v145 = vpack.c.b16 %v134, %v133
  %v146 = vpack.c.b16 %v136, %v135
  %v147 = vpack.c.b16 %v138, %v137
  %v148 = vpack.c.b16 %v140, %v139
  %v173 = vunpack.c.l.b16 %v93
  %v174 = vunpack.c.l.b16 %v94
  %v175 = vunpack.c.l.b16 %v95
  %v176 = vunpack.c.l.b16 %v96
  %v177 = vunpack.c.l.b16 %v97
  %v178 = vunpack.c.l.b16 %v98
  %v179 = vunpack.c.l.b16 %v99
  %v180 = vunpack.c.l.b16 %v100
  %v181 = vunpack.c.l.b16 %v101
  %v182 = vunpack.c.l.b16 %v102
  %v183 = vunpack.c.l.b16 %v103
  %v184 = vunpack.c.l.b16 %v104
  %v185 = vunpack.c.l.b16 %v105
  %v186 = vunpack.c.l.b16 %v106
  %v187 = vunpack.c.l.b16 %v107
  %v188 = vunpack.c.l.b16 %v108
  %v189 = vpack.c.b16 %v174, %v173
  %v190 = vpack.c.b16 %v176, %v175
  %v191 = vpack.c.b16 %v178, %v177
  %v192 = vpack.c.b16 %v180, %v179
  %v193 = vpack.c.b16 %v182, %v181
  %v194 = vpack.c.b16 %v184, %v183
  %v195 = vpack.c.b16 %v186, %v185
  %v196 = vpack.c.b16 %v188, %v187
  %205 = vmatprep.subr.bf16.mxu0 0
  %206 = vmatpush1.bf16.msra.mxu0 %v189
  %207 = vmatprep.subr.bf16.mxu0 0
  %208 = vmatpush1.bf16.msra.mxu0 %v190
  %209 = vmatprep.subr.bf16.mxu0 0
  %210 = vmatpush1.bf16.msra.mxu0 %v191
  %211 = vmatprep.subr.bf16.mxu0 0
  %212 = vmatpush1.bf16.msra.mxu0 %v192
  %213 = vmatprep.subr.bf16.mxu0 0
  %214 = vmatpush1.bf16.msra.mxu0 %v193
  %215 = vmatprep.subr.bf16.mxu0 0
  %216 = vmatpush1.bf16.msra.mxu0 %v194
  %217 = vmatprep.subr.bf16.mxu0 0
  %218 = vmatpush1.bf16.msra.mxu0 %v195
  %219 = vmatprep.subr.bf16.mxu0 0
  %220 = vmatpush1.bf16.msra.mxu0 %v196
  %221 = vmatprep.subr.bf16.mxu0 0
  %222 = vmatpush1.bf16.msra.mxu0 0
  %223 = vmatprep.subr.bf16.mxu0 0
  %224 = vmatpush1.bf16.msra.mxu0 0
  %225 = vmatprep.subr.bf16.mxu0 0
  %226 = vmatpush1.bf16.msra.mxu0 0
  %227 = vmatprep.subr.bf16.mxu0 0
  %228 = vmatpush1.bf16.msra.mxu0 0
  %229 = vmatprep.subr.bf16.mxu0 0
  %230 = vmatpush1.bf16.msra.mxu0 0
  %231 = vmatprep.subr.bf16.mxu0 0
  %232 = vmatpush1.bf16.msra.mxu0 0
  %233 = vmatprep.subr.bf16.mxu0 0
  %234 = vmatpush1.bf16.msra.mxu0 0
  %235 = vmatprep.subr.bf16.mxu0 0
  %236 = vmatpush1.bf16.msra.mxu0 0
  %237 = vmatprep.mubr.bf16.mxu0 0
  %238 = vmatmul.mubr.bf16.gmra.mrb[0].mxu0 %v141
  %v239 = vpop.f32.mrb[0].mxu0
  %v240 = vadd.f32 0.0, %v239
  %v241 = vpop.f32.mrb[0].mxu0
  %v242 = vpop.f32.mrb[0].mxu0
  %v243 = vadd.f32 0.0, %v242
  %v244 = vpop.f32.mrb[0].mxu0
  %245 = vmatprep.mubr.bf16.mxu0 0
  %246 = vmatmul.mubr.bf16.gmra.mrb[0].mxu0 %v142
  %v247 = vpop.f32.mrb[0].mxu0
  %v248 = vadd.f32 0.0, %v247
  %v249 = vpop.f32.mrb[0].mxu0
  %v250 = vpop.f32.mrb[0].mxu0
  %v251 = vadd.f32 0.0, %v250
  %v252 = vpop.f32.mrb[0].mxu0
  %253 = vmatprep.mubr.bf16.mxu0 0
  %254 = vmatmul.mubr.bf16.gmra.mrb[0].mxu0 %v143
  %v255 = vpop.f32.mrb[0].mxu0
  %v256 = vadd.f32 0.0, %v255
  %v257 = vpop.f32.mrb[0].mxu0
  %v258 = vpop.f32.mrb[0].mxu0
  %v259 = vadd.f32 0.0, %v258
  %v260 = vpop.f32.mrb[0].mxu0
  %261 = vmatprep.mubr.bf16.mxu0 0
  %262 = vmatmul.mubr.bf16.gmra.mrb[0].mxu0 %v144
  %v263 = vpop.f32.mrb[0].mxu0
  %v264 = vadd.f32 0.0, %v263
  %v265 = vpop.f32.mrb[0].mxu0
  %v266 = vpop.f32.mrb[0].mxu0
  %v267 = vadd.f32 0.0, %v266
  %v268 = vpop.f32.mrb[0].mxu0
  %269 = vmatprep.mubr.bf16.mxu0 0
  %270 = vmatmul.mubr.bf16.gmra.mrb[0].mxu0 %v145
  %v271 = vpop.f32.mrb[0].mxu0
  %v272 = vadd.f32 0.0, %v271
  %v273 = vpop.f32.mrb[0].mxu0
  %v274 = vpop.f32.mrb[0].mxu0
  %v275 = vadd.f32 0.0, %v274
  %v276 = vpop.f32.mrb[0].mxu0
  %277 = vmatprep.mubr.bf16.mxu0 0
  %278 = vmatmul.mubr.bf16.gmra.mrb[0].mxu0 %v146
  %v279 = vpop.f32.mrb[0].mxu0
  %v280 = vadd.f32 0.0, %v279
  %v281 = vpop.f32.mrb[0].mxu0
  %v282 = vpop.f32.mrb[0].mxu0
  %v283 = vadd.f32 0.0, %v282
  %v284 = vpop.f32.mrb[0].mxu0
  %285 = vmatprep.mubr.bf16.mxu0 0
  %286 = vmatmul.mubr.bf16.gmra.mrb[0].mxu0 %v147
  %v287 = vpop.f32.mrb[0].mxu0
  %v288 = vadd.f32 0.0, %v287
  %v289 = vpop.f32.mrb[0].mxu0
  %v290 = vpop.f32.mrb[0].mxu0
  %v291 = vadd.f32 0.0, %v290
  %v292 = vpop.f32.mrb[0].mxu0
  %293 = vmatprep.mubr.bf16.mxu0 0
  %294 = vmatmul.mubr.bf16.gmra.mrb[0].mxu0 %v148
  %v295 = vpop.f32.mrb[0].mxu0
  %v296 = vadd.f32 0.0, %v295
  %v297 = vpop.f32.mrb[0].mxu0
  %v298 = vpop.f32.mrb[0].mxu0
  %v299 = vadd.f32 0.0, %v298
  %v300 = vpop.f32.mrb[0].mxu0
  %301 = vdwg.mxu0
  %v302 = vadd.f32 %v77, %v240
  %v303 = vadd.f32 %v78, %v243
  %v304 = vadd.f32 %v79, %v248
  %v305 = vadd.f32 %v80, %v251
  %v306 = vadd.f32 %v81, %v256
  %v307 = vadd.f32 %v82, %v259
  %v308 = vadd.f32 %v83, %v264
  %v309 = vadd.f32 %v84, %v267
  %v310 = vadd.f32 %v85, %v272
  %v311 = vadd.f32 %v86, %v275
  %v312 = vadd.f32 %v87, %v280
  %v313 = vadd.f32 %v88, %v283
  %v314 = vadd.f32 %v89, %v288
  %v315 = vadd.f32 %v90, %v291
  %v316 = vadd.f32 %v91, %v296
  %v317 = vadd.f32 %v92, %v299
  %318 = vst [vmem:[#allocation2] sm:$0xff] %v302
  %319 = vst [vmem:[#allocation2 + $0x8] sm:$0xff] %v303
  %320 = vst [vmem:[#allocation2 + $0x10] sm:$0xff] %v304
  %321 = vst [vmem:[#allocation2 + $0x18] sm:$0xff] %v305
  %322 = vst [vmem:[#allocation2 + $0x20] sm:$0xff] %v306
  %323 = vst [vmem:[#allocation2 + $0x28] sm:$0xff] %v307
  %324 = vst [vmem:[#allocation2 + $0x30] sm:$0xff] %v308
  %325 = vst [vmem:[#allocation2 + $0x38] sm:$0xff] %v309
  %326 = vst [vmem:[#allocation2 + $0x40] sm:$0xff] %v310
  %327 = vst [vmem:[#allocation2 + $0x48] sm:$0xff] %v311
  %328 = vst [vmem:[#allocation2 + $0x50] sm:$0xff] %v312
  %329 = vst [vmem:[#allocation2 + $0x58] sm:$0xff] %v313
  %330 = vst [vmem:[#allocation2 + $0x60] sm:$0xff] %v314
  %331 = vst [vmem:[#allocation2 + $0x68] sm:$0xff] %v315
  %332 = vst [vmem:[#allocation2 + $0x70] sm:$0xff] %v316
  %333 = vst [vmem:[#allocation2 + $0x78] sm:$0xff] %v317
  %v334 = vld [vmem:[#allocation3] sm:$0xff]
  %v335 = vld [vmem:[#allocation3 + $0x8] sm:$0xff]
  %v336 = vld [vmem:[#allocation3 + $0x10] sm:$0xff]
  %v337 = vld [vmem:[#allocation3 + $0x18] sm:$0xff]
  %v338 = vld [vmem:[#allocation3 + $0x20] sm:$0xff]
  %v339 = vld [vmem:[#allocation3 + $0x28] sm:$0xff]
  %v340 = vld [vmem:[#allocation3 + $0x30] sm:$0xff]
  %v341 = vld [vmem:[#allocation3 + $0x38] sm:$0xff]
  %v342 = vld [vmem:[#allocation3 + $0x40] sm:$0xff]
  %v343 = vld [vmem:[#allocation3 + $0x48] sm:$0xff]
  %v344 = vld [vmem:[#allocation3 + $0x50] sm:$0xff]
  %v345 = vld [vmem:[#allocation3 + $0x58] sm:$0xff]
  %v346 = vld [vmem:[#allocation3 + $0x60] sm:$0xff]
  %v347 = vld [vmem:[#allocation3 + $0x68] sm:$0xff]
  %v348 = vld [vmem:[#allocation3 + $0x70] sm:$0xff]
  %v349 = vld [vmem:[#allocation3 + $0x78] sm:$0xff]
  %v350 = vunpack.c.l.bf16 %v61
  %v351 = vunpack.c.l.bf16 %v62
  %v352 = vunpack.c.l.bf16 %v63
  %v353 = vunpack.c.l.bf16 %v64
  %v354 = vunpack.c.l.bf16 %v65
  %v355 = vunpack.c.l.bf16 %v66
  %v356 = vunpack.c.l.bf16 %v67
  %v357 = vunpack.c.l.bf16 %v68
  %v358 = vunpack.c.l.bf16 %v69
  %v359 = vunpack.c.l.bf16 %v70
  %v360 = vunpack.c.l.bf16 %v71
  %v361 = vunpack.c.l.bf16 %v72
  %v362 = vunpack.c.l.bf16 %v73
  %v363 = vunpack.c.l.bf16 %v74
  %v364 = vunpack.c.l.bf16 %v75
  %v365 = vunpack.c.l.bf16 %v76
  %366 = vadd.xlane.f32.xlu0 %v350
  %v367 = vpop.xlane.xlu0 %366
  %368 = vadd.xlane.f32.xlu0 %v351
  %v369 = vpop.xlane.xlu0 %368
  %370 = vadd.xlane.f32.xlu0 %v352
  %v371 = vpop.xlane.xlu0 %370
  %372 = vadd.xlane.f32.xlu0 %v353
  %v373 = vpop.xlane.xlu0 %372
  %374 = vadd.xlane.f32.xlu0 %v354
  %v375 = vpop.xlane.xlu0 %374
  %376 = vadd.xlane.f32.xlu0 %v355
  %v377 = vpop.xlane.xlu0 %376
  %378 = vadd.xlane.f32.xlu0 %v356
  %v379 = vpop.xlane.xlu0 %378
  %380 = vadd.xlane.f32.xlu0 %v357
  %v381 = vpop.xlane.xlu0 %380
  %382 = vadd.xlane.f32.xlu0 %v358
  %v383 = vpop.xlane.xlu0 %382
  %384 = vadd.xlane.f32.xlu0 %v359
  %v385 = vpop.xlane.xlu0 %384
  %386 = vadd.xlane.f32.xlu0 %v360
  %v387 = vpop.xlane.xlu0 %386
  %388 = vadd.xlane.f32.xlu0 %v361
  %v389 = vpop.xlane.xlu0 %388
  %390 = vadd.xlane.f32.xlu0 %v362
  %v391 = vpop.xlane.xlu0 %390
  %392 = vadd.xlane.f32.xlu0 %v363
  %v393 = vpop.xlane.xlu0 %392
  %394 = vadd.xlane.f32.xlu0 %v364
  %v395 = vpop.xlane.xlu0 %394
  %396 = vadd.xlane.f32.xlu0 %v365
  %v397 = vpop.xlane.xlu0 %396
  %v398 = vadd.f32 %v334, %v367
  %v399 = vadd.f32 %v335, %v369
  %v400 = vadd.f32 %v336, %v371
  %v401 = vadd.f32 %v337, %v373
  %v402 = vadd.f32 %v338, %v375
  %v403 = vadd.f32 %v339, %v377
  %v404 = vadd.f32 %v340, %v379
  %v405 = vadd.f32 %v341, %v381
  %v406 = vadd.f32 %v342, %v383
  %v407 = vadd.f32 %v343, %v385
  %v408 = vadd.f32 %v344, %v387
  %v409 = vadd.f32 %v345, %v389
  %v410 = vadd.f32 %v346, %v391
  %v411 = vadd.f32 %v347, %v393
  %v412 = vadd.f32 %v348, %v395
  %v413 = vadd.f32 %v349, %v397
  %vm414 = vcmask 7168
  %415 = vst.msk [vmem:[#allocation3] sm:$0xff] %vm414, %v398
  %416 = vst.msk [vmem:[#allocation3 + $0x8] sm:$0xff] %vm414, %v399
  %417 = vst.msk [vmem:[#allocation3 + $0x10] sm:$0xff] %vm414, %v400
  %418 = vst.msk [vmem:[#allocation3 + $0x18] sm:$0xff] %vm414, %v401
  %419 = vst.msk [vmem:[#allocation3 + $0x20] sm:$0xff] %vm414, %v402
  %420 = vst.msk [vmem:[#allocation3 + $0x28] sm:$0xff] %vm414, %v403
  %421 = vst.msk [vmem:[#allocation3 + $0x30] sm:$0xff] %vm414, %v404
  %422 = vst.msk [vmem:[#allocation3 + $0x38] sm:$0xff] %vm414, %v405
  %423 = vst.msk [vmem:[#allocation3 + $0x40] sm:$0xff] %vm414, %v406
  %424 = vst.msk [vmem:[#allocation3 + $0x48] sm:$0xff] %vm414, %v407
  %425 = vst.msk [vmem:[#allocation3 + $0x50] sm:$0xff] %vm414, %v408
  %426 = vst.msk [vmem:[#allocation3 + $0x58] sm:$0xff] %vm414, %v409
  %427 = vst.msk [vmem:[#allocation3 + $0x60] sm:$0xff] %vm414, %v410
  %428 = vst.msk [vmem:[#allocation3 + $0x68] sm:$0xff] %vm414, %v411
  %429 = vst.msk [vmem:[#allocation3 + $0x70] sm:$0xff] %vm414, %v412
  %430 = vst.msk [vmem:[#allocation3 + $0x78] sm:$0xff] %vm414, %v413
  // Predicated region
  $region30: #{sage_forward.3} parent=0 // pred_check
    %p431 = pneg %p24
  $region31: #{sage_forward.3} parent=0 // pred_check_branch
    %433 = sbr.rel (%p431) target = $region33
  $region32: #{sage_forward.3} parent=0 // pred_region
    %v434 = vld [vmem:[#allocation3] sm:$0xff]
    %v435 = vld [vmem:[#allocation3 + $0x8] sm:$0xff]
    %v436 = vld [vmem:[#allocation3 + $0x10] sm:$0xff]
    %v437 = vld [vmem:[#allocation3 + $0x18] sm:$0xff]
    %v438 = vld [vmem:[#allocation3 + $0x20] sm:$0xff]
    %v439 = vld [vmem:[#allocation3 + $0x28] sm:$0xff]
    %v440 = vld [vmem:[#allocation3 + $0x30] sm:$0xff]
    %v441 = vld [vmem:[#allocation3 + $0x38] sm:$0xff]
    %v442 = vld [vmem:[#allocation3 + $0x40] sm:$0xff]
    %v443 = vld [vmem:[#allocation3 + $0x48] sm:$0xff]
    %v444 = vld [vmem:[#allocation3 + $0x50] sm:$0xff]
    %v445 = vld [vmem:[#allocation3 + $0x58] sm:$0xff]
    %v446 = vld [vmem:[#allocation3 + $0x60] sm:$0xff]
    %v447 = vld [vmem:[#allocation3 + $0x68] sm:$0xff]
    %v448 = vld [vmem:[#allocation3 + $0x70] sm:$0xff]
    %v449 = vld [vmem:[#allocation3 + $0x78] sm:$0xff]
    %v450 = vmax.f32 %v434, 1.0
    %v451 = vmax.f32 %v435, 1.0
    %v452 = vmax.f32 %v436, 1.0
    %v453 = vmax.f32 %v437, 1.0
    %v454 = vmax.f32 %v438, 1.0
    %v455 = vmax.f32 %v439, 1.0
    %v456 = vmax.f32 %v440, 1.0
    %v457 = vmax.f32 %v441, 1.0
    %v458 = vmax.f32 %v442, 1.0
    %v459 = vmax.f32 %v443, 1.0
    %v460 = vmax.f32 %v444, 1.0
    %v461 = vmax.f32 %v445, 1.0
    %v462 = vmax.f32 %v446, 1.0
    %v463 = vmax.f32 %v447, 1.0
    %v464 = vmax.f32 %v448, 1.0
    %v465 = vmax.f32 %v449, 1.0
    %v466 = vrcp.pop %v450
    %v467 = vmul.f32 1.0, %v466
    %v468 = vrcp.pop %v451
    %v469 = vmul.f32 1.0, %v468
    %v470 = vrcp.pop %v452
    %v471 = vmul.f32 1.0, %v470
    %v472 = vrcp.pop %v453
    %v473 = vmul.f32 1.0, %v472
    %v474 = vrcp.pop %v454
    %v475 = vmul.f32 1.0, %v474
    %v476 = vrcp.pop %v455
    %v477 = vmul.f32 1.0, %v476
    %v478 = vrcp.pop %v456
    %v479 = vmul.f32 1.0, %v478
    %v480 = vrcp.pop %v457
    %v481 = vmul.f32 1.0, %v480
    %v482 = vrcp.pop %v458
    %v483 = vmul.f32 1.0, %v482
    %v484 = vrcp.pop %v459
    %v485 = vmul.f32 1.0, %v484
    %v486 = vrcp.pop %v460
    %v487 = vmul.f32 1.0, %v486
    %v488 = vrcp.pop %v461
    %v489 = vmul.f32 1.0, %v488
    %v490 = vrcp.pop %v462
    %v491 = vmul.f32 1.0, %v490
    %v492 = vrcp.pop %v463
    %v493 = vmul.f32 1.0, %v492
    %v494 = vrcp.pop %v464
    %v495 = vmul.f32 1.0, %v494
    %v496 = vrcp.pop %v465
    %v497 = vmul.f32 1.0, %v496
    %v498 = vld [vmem:[#allocation2] sm:$0xff]
    %v499 = vld [vmem:[#allocation2 + $0x8] sm:$0xff]
    %v500 = vld [vmem:[#allocation2 + $0x10] sm:$0xff]
    %v501 = vld [vmem:[#allocation2 + $0x18] sm:$0xff]
    %v502 = vld [vmem:[#allocation2 + $0x20] sm:$0xff]
    %v503 = vld [vmem:[#allocation2 + $0x28] sm:$0xff]
    %v504 = vld [vmem:[#allocation2 + $0x30] sm:$0xff]
    %v505 = vld [vmem:[#allocation2 + $0x38] sm:$0xff]
    %v506 = vld [vmem:[#allocation2 + $0x40] sm:$0xff]
    %v507 = vld [vmem:[#allocation2 + $0x48] sm:$0xff]
    %v508 = vld [vmem:[#allocation2 + $0x50] sm:$0xff]
    %v509 = vld [vmem:[#allocation2 + $0x58] sm:$0xff]
    %v510 = vld [vmem:[#allocation2 + $0x60] sm:$0xff]
    %v511 = vld [vmem:[#allocation2 + $0x68] sm:$0xff]
    %v512 = vld [vmem:[#allocation2 + $0x70] sm:$0xff]
    %v513 = vld [vmem:[#allocation2 + $0x78] sm:$0xff]
    %515 = vset.pattern.permute.xlu0 0
    %516 = vperm.xlu0 %515, %v467
    %v517 = vpop.permute.xlu0 %516
    %520 = vset.pattern.permute.xlu0 0
    %521 = vperm.xlu0 %520, %v469
    %v522 = vpop.permute.xlu0 %521
    %525 = vset.pattern.permute.xlu0 0
    %526 = vperm.xlu0 %525, %v471
    %v527 = vpop.permute.xlu0 %526
    %530 = vset.pattern.permute.xlu0 0
    %531 = vperm.xlu0 %530, %v473
    %v532 = vpop.permute.xlu0 %531
    %535 = vset.pattern.permute.xlu0 0
    %536 = vperm.xlu0 %535, %v475
    %v537 = vpop.permute.xlu0 %536
    %540 = vset.pattern.permute.xlu0 0
    %541 = vperm.xlu0 %540, %v477
    %v542 = vpop.permute.xlu0 %541
    %545 = vset.pattern.permute.xlu0 0
    %546 = vperm.xlu0 %545, %v479
    %v547 = vpop.permute.xlu0 %546
    %550 = vset.pattern.permute.xlu0 0
    %551 = vperm.xlu0 %550, %v481
    %v552 = vpop.permute.xlu0 %551
    %555 = vset.pattern.permute.xlu0 0
    %556 = vperm.xlu0 %555, %v483
    %v557 = vpop.permute.xlu0 %556
    %560 = vset.pattern.permute.xlu0 0
    %561 = vperm.xlu0 %560, %v485
    %v562 = vpop.permute.xlu0 %561
    %565 = vset.pattern.permute.xlu0 0
    %566 = vperm.xlu0 %565, %v487
    %v567 = vpop.permute.xlu0 %566
    %570 = vset.pattern.permute.xlu0 0
    %571 = vperm.xlu0 %570, %v489
    %v572 = vpop.permute.xlu0 %571
    %575 = vset.pattern.permute.xlu0 0
    %576 = vperm.xlu0 %575, %v491
    %v577 = vpop.permute.xlu0 %576
    %580 = vset.pattern.permute.xlu0 0
    %581 = vperm.xlu0 %580, %v493
    %v582 = vpop.permute.xlu0 %581
    %585 = vset.pattern.permute.xlu0 0
    %586 = vperm.xlu0 %585, %v495
    %v587 = vpop.permute.xlu0 %586
    %590 = vset.pattern.permute.xlu0 0
    %591 = vperm.xlu0 %590, %v497
    %v592 = vpop.permute.xlu0 %591
    %v594 = vmul.f32 %v498, %v517
    %v595 = vmul.f32 %v499, %v522
    %v596 = vmul.f32 %v500, %v527
    %v597 = vmul.f32 %v501, %v532
    %v598 = vmul.f32 %v502, %v537
    %v599 = vmul.f32 %v503, %v542
    %v600 = vmul.f32 %v504, %v547
    %v601 = vmul.f32 %v505, %v552
    %v602 = vmul.f32 %v506, %v557
    %v603 = vmul.f32 %v507, %v562
    %v604 = vmul.f32 %v508, %v567
    %v605 = vmul.f32 %v509, %v572
    %v606 = vmul.f32 %v510, %v577
    %v607 = vmul.f32 %v511, %v582
    %v608 = vmul.f32 %v512, %v587
    %v609 = vmul.f32 %v513, %v592
    %v610 = vld [vmem:[%s2] sm:$0xff]
    %v611 = vld [vmem:[%s2 + $0x8] sm:$0xff]
    %v612 = vld [vmem:[%s2 + $0x10] sm:$0xff]
    %v613 = vld [vmem:[%s2 + $0x18] sm:$0xff]
    %v614 = vld [vmem:[%s2 + $0x20] sm:$0xff]
    %v615 = vld [vmem:[%s2 + $0x28] sm:$0xff]
    %v616 = vld [vmem:[%s2 + $0x30] sm:$0xff]
    %v617 = vld [vmem:[%s2 + $0x38] sm:$0xff]
    %v618 = vld [vmem:[%s2 + $0x40] sm:$0xff]
    %v619 = vld [vmem:[%s2 + $0x48] sm:$0xff]
    %v620 = vld [vmem:[%s2 + $0x50] sm:$0xff]
    %v621 = vld [vmem:[%s2 + $0x58] sm:$0xff]
    %v622 = vld [vmem:[%s2 + $0x60] sm:$0xff]
    %v623 = vld [vmem:[%s2 + $0x68] sm:$0xff]
    %v624 = vld [vmem:[%s2 + $0x70] sm:$0xff]
    %v625 = vld [vmem:[%s2 + $0x78] sm:$0xff]
    %v626 = vld [vmem:[%s3] sm:$0xff]
    %v627 = vld [vmem:[%s3 + $0x8] sm:$0xff]
    %v628 = vld [vmem:[%s3 + $0x10] sm:$0xff]
    %v629 = vld [vmem:[%s3 + $0x18] sm:$0xff]
    %v630 = vld [vmem:[%s3 + $0x20] sm:$0xff]
    %v631 = vld [vmem:[%s3 + $0x28] sm:$0xff]
    %v632 = vld [vmem:[%s3 + $0x30] sm:$0xff]
    %v633 = vld [vmem:[%s3 + $0x38] sm:$0xff]
    %v634 = vld [vmem:[%s3 + $0x40] sm:$0xff]
    %v635 = vld [vmem:[%s3 + $0x48] sm:$0xff]
    %v636 = vld [vmem:[%s3 + $0x50] sm:$0xff]
    %v637 = vld [vmem:[%s3 + $0x58] sm:$0xff]
    %v638 = vld [vmem:[%s3 + $0x60] sm:$0xff]
    %v639 = vld [vmem:[%s3 + $0x68] sm:$0xff]
    %v640 = vld [vmem:[%s3 + $0x70] sm:$0xff]
    %v641 = vld [vmem:[%s3 + $0x78] sm:$0xff]
    %v642 = vld [vmem:[%s4] sm:$0xff]
    %v643 = vld [vmem:[%s4 + $0x8] sm:$0xff]
    %v644 = vld [vmem:[%s4 + $0x10] sm:$0xff]
    %v645 = vld [vmem:[%s4 + $0x18] sm:$0xff]
    %v646 = vld [vmem:[%s4 + $0x20] sm:$0xff]
    %v647 = vld [vmem:[%s4 + $0x28] sm:$0xff]
    %v648 = vld [vmem:[%s4 + $0x30] sm:$0xff]
    %v649 = vld [vmem:[%s4 + $0x38] sm:$0xff]
    %v650 = vld [vmem:[%s4 + $0x40] sm:$0xff]
    %v651 = vld [vmem:[%s4 + $0x48] sm:$0xff]
    %v652 = vld [vmem:[%s4 + $0x50] sm:$0xff]
    %v653 = vld [vmem:[%s4 + $0x58] sm:$0xff]
    %v654 = vld [vmem:[%s4 + $0x60] sm:$0xff]
    %v655 = vld [vmem:[%s4 + $0x68] sm:$0xff]
    %v656 = vld [vmem:[%s4 + $0x70] sm:$0xff]
    %v657 = vld [vmem:[%s4 + $0x78] sm:$0xff]
    %658 = vmatprep.subr.mxu0 0.0
    %659 = vmatpush1.msra.mxu0 %v642
    %660 = vmatprep.subr.mxu0 0.0
    %661 = vmatpush1.msra.mxu0 %v643
    %662 = vmatprep.subr.mxu0 0.0
    %663 = vmatpush1.msra.mxu0 %v644
    %664 = vmatprep.subr.mxu0 0.0
    %665 = vmatpush1.msra.mxu0 %v645
    %666 = vmatprep.subr.mxu0 0.0
    %667 = vmatpush1.msra.mxu0 %v646
    %668 = vmatprep.subr.mxu0 0.0
    %669 = vmatpush1.msra.mxu0 %v647
    %670 = vmatprep.subr.mxu0 0.0
    %671 = vmatpush1.msra.mxu0 %v648
    %672 = vmatprep.subr.mxu0 0.0
    %673 = vmatpush1.msra.mxu0 %v649
    %674 = vmatprep.subr.mxu0 0.0
    %675 = vmatpush1.msra.mxu0 %v650
    %676 = vmatprep.subr.mxu0 0.0
    %677 = vmatpush1.msra.mxu0 %v651
    %678 = vmatprep.subr.mxu0 0.0
    %679 = vmatpush1.msra.mxu0 %v652
    %680 = vmatprep.subr.mxu0 0.0
    %681 = vmatpush1.msra.mxu0 %v653
    %682 = vmatprep.subr.mxu0 0.0
    %683 = vmatpush1.msra.mxu0 %v654
    %684 = vmatprep.subr.mxu0 0.0
    %685 = vmatpush1.msra.mxu0 %v655
    %686 = vmatprep.subr.mxu0 0.0
    %687 = vmatpush1.msra.mxu0 %v656
    %688 = vmatprep.subr.mxu0 0.0
    %689 = vmatpush1.msra.mxu0 %v657
    %690 = vmatprep.subr.mxu0 0.0
    %691 = vmatpush1.msra.mxu0 0.0
    %692 = vmatprep.subr.mxu0 0.0
    %693 = vmatpush1.msra.mxu0 0.0
    %694 = vmatprep.subr.mxu0 0.0
    %695 = vmatpush1.msra.mxu0 0.0
    %696 = vmatprep.subr.mxu0 0.0
    %697 = vmatpush1.msra.mxu0 0.0
    %698 = vmatprep.subr.mxu0 0.0
    %699 = vmatpush1.msra.mxu0 0.0
    %700 = vmatprep.subr.mxu0 0.0
    %701 = vmatpush1.msra.mxu0 0.0
    %702 = vmatprep.subr.mxu0 0.0
    %703 = vmatpush1.msra.mxu0 0.0
    %704 = vmatprep.subr.mxu0 0.0
    %705 = vmatpush1.msra.mxu0 0.0
    %706 = vmatprep.subr.mxu0 0.0
    %707 = vmatpush1.msra.mxu0 0.0
    %708 = vmatprep.subr.mxu0 0.0
    %709 = vmatpush1.msra.mxu0 0.0
    %710 = vmatprep.subr.mxu0 0.0
    %711 = vmatpush1.msra.mxu0 0.0
    %712 = vmatprep.subr.mxu0 0.0
    %713 = vmatpush1.msra.mxu0 0.0
    %714 = vmatprep.subr.mxu0 0.0
    %715 = vmatpush1.msra.mxu0 0.0
    %716 = vmatprep.subr.mxu0 0.0
    %717 = vmatpush1.msra.mxu0 0.0
    %718 = vmatprep.subr.mxu0 0.0
    %719 = vmatpush1.msra.mxu0 0.0
    %720 = vmatprep.subr.mxu0 0.0
    %721 = vmatpush1.msra.mxu0 0.0
    %722 = vmatprep.mubr.f32.mxu0 0.0
    %723 = vmatmul.mubr.f32.gmra.mrb[0].mxu0 %v594
    %v724 = vpop.f32.mrb[0].mxu0
    %v725 = vadd.f32 0.0, %v724
    %v726 = vpop.f32.mrb[0].mxu0
    %727 = vmatprep.mubr.f32.mxu0 0.0
    %728 = vmatmul.mubr.f32.gmra.mrb[0].mxu0 %v595
    %v729 = vpop.f32.mrb[0].mxu0
    %v730 = vadd.f32 0.0, %v729
    %v731 = vpop.f32.mrb[0].mxu0
    %732 = vmatprep.mubr.f32.mxu0 0.0
    %733 = vmatmul.mubr.f32.gmra.mrb[0].mxu0 %v596
    %v734 = vpop.f32.mrb[0].mxu0
    %v735 = vadd.f32 0.0, %v734
    %v736 = vpop.f32.mrb[0].mxu0
    %737 = vmatprep.mubr.f32.mxu0 0.0
    %738 = vmatmul.mubr.f32.gmra.mrb[0].mxu0 %v597
    %v739 = vpop.f32.mrb[0].mxu0
    %v740 = vadd.f32 0.0, %v739
    %v741 = vpop.f32.mrb[0].mxu0
    %742 = vmatprep.mubr.f32.mxu0 0.0
    %743 = vmatmul.mubr.f32.gmra.mrb[0].mxu0 %v598
    %v744 = vpop.f32.mrb[0].mxu0
    %v745 = vadd.f32 0.0, %v744
    %v746 = vpop.f32.mrb[0].mxu0
    %747 = vmatprep.mubr.f32.mxu0 0.0
    %748 = vmatmul.mubr.f32.gmra.mrb[0].mxu0 %v599
    %v749 = vpop.f32.mrb[0].mxu0
    %v750 = vadd.f32 0.0, %v749
    %v751 = vpop.f32.mrb[0].mxu0
    %752 = vmatprep.mubr.f32.mxu0 0.0
    %753 = vmatmul.mubr.f32.gmra.mrb[0].mxu0 %v600
    %v754 = vpop.f32.mrb[0].mxu0
    %v755 = vadd.f32 0.0, %v754
    %v756 = vpop.f32.mrb[0].mxu0
    %757 = vmatprep.mubr.f32.mxu0 0.0
    %758 = vmatmul.mubr.f32.gmra.mrb[0].mxu0 %v601
    %v759 = vpop.f32.mrb[0].mxu0
    %v760 = vadd.f32 0.0, %v759
    %v761 = vpop.f32.mrb[0].mxu0
    %762 = vmatprep.mubr.f32.mxu0 0.0
    %763 = vmatmul.mubr.f32.gmra.mrb[0].mxu0 %v602
    %v764 = vpop.f32.mrb[0].mxu0
    %v765 = vadd.f32 0.0, %v764
    %v766 = vpop.f32.mrb[0].mxu0
    %767 = vmatprep.mubr.f32.mxu0 0.0
    %768 = vmatmul.mubr.f32.gmra.mrb[0].mxu0 %v603
    %v769 = vpop.f32.mrb[0].mxu0
    %v770 = vadd.f32 0.0, %v769
    %v771 = vpop.f32.mrb[0].mxu0
    %772 = vmatprep.mubr.f32.mxu0 0.0
    %773 = vmatmul.mubr.f32.gmra.mrb[0].mxu0 %v604
    %v774 = vpop.f32.mrb[0].mxu0
    %v775 = vadd.f32 0.0, %v774
    %v776 = vpop.f32.mrb[0].mxu0
    %777 = vmatprep.mubr.f32.mxu0 0.0
    %778 = vmatmul.mubr.f32.gmra.mrb[0].mxu0 %v605
    %v779 = vpop.f32.mrb[0].mxu0
    %v780 = vadd.f32 0.0, %v779
    %v781 = vpop.f32.mrb[0].mxu0
    %782 = vmatprep.mubr.f32.mxu0 0.0
    %783 = vmatmul.mubr.f32.gmra.mrb[0].mxu0 %v606
    %v784 = vpop.f32.mrb[0].mxu0
    %v785 = vadd.f32 0.0, %v784
    %v786 = vpop.f32.mrb[0].mxu0
    %787 = vmatprep.mubr.f32.mxu0 0.0
    %788 = vmatmul.mubr.f32.gmra.mrb[0].mxu0 %v607
    %v789 = vpop.f32.mrb[0].mxu0
    %v790 = vadd.f32 0.0, %v789
    %v791 = vpop.f32.mrb[0].mxu0
    %792 = vmatprep.mubr.f32.mxu0 0.0
    %793 = vmatmul.mubr.f32.gmra.mrb[0].mxu0 %v608
    %v794 = vpop.f32.mrb[0].mxu0
    %v795 = vadd.f32 0.0, %v794
    %v796 = vpop.f32.mrb[0].mxu0
    %797 = vmatprep.mubr.f32.mxu0 0.0
    %798 = vmatmul.mubr.f32.gmra.mrb[0].mxu0 %v609
    %v799 = vpop.f32.mrb[0].mxu0
    %v800 = vadd.f32 0.0, %v799
    %v801 = vpop.f32.mrb[0].mxu0
    %802 = vdwg.mxu0
    %803 = vmatprep.subr.mxu0 0.0
    %804 = vmatpush1.msra.mxu0 %v626
    %805 = vmatprep.subr.mxu0 0.0
    %806 = vmatpush1.msra.mxu0 %v627
    %807 = vmatprep.subr.mxu0 0.0
    %808 = vmatpush1.msra.mxu0 %v628
    %809 = vmatprep.subr.mxu0 0.0
    %810 = vmatpush1.msra.mxu0 %v629
    %811 = vmatprep.subr.mxu0 0.0
    %812 = vmatpush1.msra.mxu0 %v630
    %813 = vmatprep.subr.mxu0 0.0
    %814 = vmatpush1.msra.mxu0 %v631
    %815 = vmatprep.subr.mxu0 0.0
    %816 = vmatpush1.msra.mxu0 %v632
    %817 = vmatprep.subr.mxu0 0.0
    %818 = vmatpush1.msra.mxu0 %v633
    %819 = vmatprep.subr.mxu0 0.0
    %820 = vmatpush1.msra.mxu0 %v634
    %821 = vmatprep.subr.mxu0 0.0
    %822 = vmatpush1.msra.mxu0 %v635
    %823 = vmatprep.subr.mxu0 0.0
    %824 = vmatpush1.msra.mxu0 %v636
    %825 = vmatprep.subr.mxu0 0.0
    %826 = vmatpush1.msra.mxu0 %v637
    %827 = vmatprep.subr.mxu0 0.0
    %828 = vmatpush1.msra.mxu0 %v638
    %829 = vmatprep.subr.mxu0 0.0
    %830 = vmatpush1.msra.mxu0 %v639
    %831 = vmatprep.subr.mxu0 0.0
    %832 = vmatpush1.msra.mxu0 %v640
    %833 = vmatprep.subr.mxu0 0.0
    %834 = vmatpush1.msra.mxu0 %v641
    %835 = vmatprep.subr.mxu0 0.0
    %836 = vmatpush1.msra.mxu0 0.0
    %837 = vmatprep.subr.mxu0 0.0
    %838 = vmatpush1.msra.mxu0 0.0
    %839 = vmatprep.subr.mxu0 0.0
    %840 = vmatpush1.msra.mxu0 0.0
    %841 = vmatprep.subr.mxu0 0.0
    %842 = vmatpush1.msra.mxu0 0.0
    %843 = vmatprep.subr.mxu0 0.0
    %844 = vmatpush1.msra.mxu0 0.0
    %845 = vmatprep.subr.mxu0 0.0
    %846 = vmatpush1.msra.mxu0 0.0
    %847 = vmatprep.subr.mxu0 0.0
    %848 = vmatpush1.msra.mxu0 0.0
    %849 = vmatprep.subr.mxu0 0.0
    %850 = vmatpush1.msra.mxu0 0.0
    %851 = vmatprep.subr.mxu0 0.0
    %852 = vmatpush1.msra.mxu0 0.0
    %853 = vmatprep.subr.mxu0 0.0
    %854 = vmatpush1.msra.mxu0 0.0
    %855 = vmatprep.subr.mxu0 0.0
    %856 = vmatpush1.msra.mxu0 0.0
    %857 = vmatprep.subr.mxu0 0.0
    %858 = vmatpush1.msra.mxu0 0.0
    %859 = vmatprep.subr.mxu0 0.0
    %860 = vmatpush1.msra.mxu0 0.0
    %861 = vmatprep.subr.mxu0 0.0
    %862 = vmatpush1.msra.mxu0 0.0
    %863 = vmatprep.subr.mxu0 0.0
    %864 = vmatpush1.msra.mxu0 0.0
    %865 = vmatprep.subr.mxu0 0.0
    %866 = vmatpush1.msra.mxu0 0.0
    %867 = vmatprep.mubr.f32.mxu0 0.0
    %868 = vmatmul.mubr.f32.gmra.mrb[0].mxu0 %v610
    %v869 = vpop.f32.mrb[0].mxu0
    %v870 = vadd.f32 %v725, %v869
    %v871 = vpop.f32.mrb[0].mxu0
    %872 = vmatprep.mubr.f32.mxu0 0.0
    %873 = vmatmul.mubr.f32.gmra.mrb[0].mxu0 %v611
    %v874 = vpop.f32.mrb[0].mxu0
    %v875 = vadd.f32 %v730, %v874
    %v876 = vpop.f32.mrb[0].mxu0
    %877 = vmatprep.mubr.f32.mxu0 0.0
    %878 = vmatmul.mubr.f32.gmra.mrb[0].mxu0 %v612
    %v879 = vpop.f32.mrb[0].mxu0
    %v880 = vadd.f32 %v735, %v879
    %v881 = vpop.f32.mrb[0].mxu0
    %882 = vmatprep.mubr.f32.mxu0 0.0
    %883 = vmatmul.mubr.f32.gmra.mrb[0].mxu0 %v613
    %v884 = vpop.f32.mrb[0].mxu0
    %v885 = vadd.f32 %v740, %v884
    %v886 = vpop.f32.mrb[0].mxu0
    %887 = vmatprep.mubr.f32.mxu0 0.0
    %888 = vmatmul.mubr.f32.gmra.mrb[0].mxu0 %v614
    %v889 = vpop.f32.mrb[0].mxu0
    %v890 = vadd.f32 %v745, %v889
    %v891 = vpop.f32.mrb[0].mxu0
    %892 = vmatprep.mubr.f32.mxu0 0.0
    %893 = vmatmul.mubr.f32.gmra.mrb[0].mxu0 %v615
    %v894 = vpop.f32.mrb[0].mxu0
    %v895 = vadd.f32 %v750, %v894
    %v896 = vpop.f32.mrb[0].mxu0
    %897 = vmatprep.mubr.f32.mxu0 0.0
    %898 = vmatmul.mubr.f32.gmra.mrb[0].mxu0 %v616
    %v899 = vpop.f32.mrb[0].mxu0
    %v900 = vadd.f32 %v755, %v899
    %v901 = vpop.f32.mrb[0].mxu0
    %902 = vmatprep.mubr.f32.mxu0 0.0
    %903 = vmatmul.mubr.f32.gmra.mrb[0].mxu0 %v617
    %v904 = vpop.f32.mrb[0].mxu0
    %v905 = vadd.f32 %v760, %v904
    %v906 = vpop.f32.mrb[0].mxu0
    %907 = vmatprep.mubr.f32.mxu0 0.0
    %908 = vmatmul.mubr.f32.gmra.mrb[0].mxu0 %v618
    %v909 = vpop.f32.mrb[0].mxu0
    %v910 = vadd.f32 %v765, %v909
    %v911 = vpop.f32.mrb[0].mxu0
    %912 = vmatprep.mubr.f32.mxu0 0.0
    %913 = vmatmul.mubr.f32.gmra.mrb[0].mxu0 %v619
    %v914 = vpop.f32.mrb[0].mxu0
    %v915 = vadd.f32 %v770, %v914
    %v916 = vpop.f32.mrb[0].mxu0
    %917 = vmatprep.mubr.f32.mxu0 0.0
    %918 = vmatmul.mubr.f32.gmra.mrb[0].mxu0 %v620
    %v919 = vpop.f32.mrb[0].mxu0
    %v920 = vadd.f32 %v775, %v919
    %v921 = vpop.f32.mrb[0].mxu0
    %922 = vmatprep.mubr.f32.mxu0 0.0
    %923 = vmatmul.mubr.f32.gmra.mrb[0].mxu0 %v621
    %v924 = vpop.f32.mrb[0].mxu0
    %v925 = vadd.f32 %v780, %v924
    %v926 = vpop.f32.mrb[0].mxu0
    %927 = vmatprep.mubr.f32.mxu0 0.0
    %928 = vmatmul.mubr.f32.gmra.mrb[0].mxu0 %v622
    %v929 = vpop.f32.mrb[0].mxu0
    %v930 = vadd.f32 %v785, %v929
    %v931 = vpop.f32.mrb[0].mxu0
    %932 = vmatprep.mubr.f32.mxu0 0.0
    %933 = vmatmul.mubr.f32.gmra.mrb[0].mxu0 %v623
    %v934 = vpop.f32.mrb[0].mxu0
    %v935 = vadd.f32 %v790, %v934
    %v936 = vpop.f32.mrb[0].mxu0
    %937 = vmatprep.mubr.f32.mxu0 0.0
    %938 = vmatmul.mubr.f32.gmra.mrb[0].mxu0 %v624
    %v939 = vpop.f32.mrb[0].mxu0
    %v940 = vadd.f32 %v795, %v939
    %v941 = vpop.f32.mrb[0].mxu0
    %942 = vmatprep.mubr.f32.mxu0 0.0
    %943 = vmatmul.mubr.f32.gmra.mrb[0].mxu0 %v625
    %v944 = vpop.f32.mrb[0].mxu0
    %v945 = vadd.f32 %v800, %v944
    %v946 = vpop.f32.mrb[0].mxu0
    %947 = vdwg.mxu0
    %v948 = vld [vmem:[%s5] sm:$0x1]
    %v950 = vlaneseq
    %v951 = vshrl.u32 %v950, 7
    %v952 = vsub.s32 0, %v951
    %v953 = vrot.slane %v948, %v952
    %v955 = vadd.f32 %v870, %v953
    %v956 = vadd.f32 %v875, %v953
    %v957 = vadd.f32 %v880, %v953
    %v958 = vadd.f32 %v885, %v953
    %v959 = vadd.f32 %v890, %v953
    %v960 = vadd.f32 %v895, %v953
    %v961 = vadd.f32 %v900, %v953
    %v962 = vadd.f32 %v905, %v953
    %v963 = vadd.f32 %v910, %v953
    %v964 = vadd.f32 %v915, %v953
    %v965 = vadd.f32 %v920, %v953
    %v966 = vadd.f32 %v925, %v953
    %v967 = vadd.f32 %v930, %v953
    %v968 = vadd.f32 %v935, %v953
    %v969 = vadd.f32 %v940, %v953
    %v970 = vadd.f32 %v945, %v953
    %971 = vst [vmem:[%s6] sm:$0xff] %v955
    %972 = vst [vmem:[%s6 + $0x8] sm:$0xff] %v956
    %973 = vst [vmem:[%s6 + $0x10] sm:$0xff] %v957
    %974 = vst [vmem:[%s6 + $0x18] sm:$0xff] %v958
    %975 = vst [vmem:[%s6 + $0x20] sm:$0xff] %v959
    %976 = vst [vmem:[%s6 + $0x28] sm:$0xff] %v960
    %977 = vst [vmem:[%s6 + $0x30] sm:$0xff] %v961
    %978 = vst [vmem:[%s6 + $0x38] sm:$0xff] %v962
    %979 = vst [vmem:[%s6 + $0x40] sm:$0xff] %v963
    %980 = vst [vmem:[%s6 + $0x48] sm:$0xff] %v964
    %981 = vst [vmem:[%s6 + $0x50] sm:$0xff] %v965
    %982 = vst [vmem:[%s6 + $0x58] sm:$0xff] %v966
    %983 = vst [vmem:[%s6 + $0x60] sm:$0xff] %v967
    %984 = vst [vmem:[%s6 + $0x68] sm:$0xff] %v968
    %985 = vst [vmem:[%s6 + $0x70] sm:$0xff] %v969
    %986 = vst [vmem:[%s6 + $0x78] sm:$0xff] %v970
  $region33: #{sage_forward.3} parent=0 // pred_fallthru
    _
  // Predicated region
  $region34: #{sage_forward.3} parent=0 // pred_check
    _
  $region35: #{sage_forward.3} parent=0 // pred_check_branch
    %988 = sbr.rel (0) target = $region37
  $region36: #{sage_forward.3} parent=0 // pred_region
    _
  $region37: #{sage_forward.3} parent=0 // pred_fallthru
    _
  // Predicated region
  $region38: #{sage_forward.3} parent=0 // pred_check
    _
  $region39: #{sage_forward.3} parent=0 // pred_check_branch
    %990 = sbr.rel (0) target = $region41
  $region40: #{sage_forward.3} parent=0 // pred_region
    _
  $region41: #{sage_forward.3} parent=0 // pred_fallthru
    _

// kernel: sage_forward.2
$region0: #{sage_forward.2}
  #allocation0 [shape = 'u32[]', space=smem, size = 0x4, offset = 0x4, fixed_abs, tag = 'smem constant byte address 0x4 - core index']
  #allocation1 [shape = 'u32[144,128]{1,0:T(1,128)}', space=vmem, size = 0x12000, scoped, tag = 'internal scratch']
  #allocation2 [shape = 'f32[128,128]{1,0:T(8,128)}', space=vmem, size = 0x10000, scoped, tag = 'scratch operand']
  #allocation3 [shape = 'f32[128,1]{1,0:T(8,128)}', space=vmem, size = 0x10000, scoped, tag = 'scratch operand']
  %s0 = inlined_call_operand.vmem [shape: bf16[128,128], index: 0, kind: input, shape index: {}]
  %s1 = inlined_call_operand.vmem [shape: bf16[128,128], index: 1, kind: input, shape index: {}]
  %s2 = inlined_call_operand.vmem [shape: f32[128,256], index: 2, kind: input, shape index: {}]
  %s3 = inlined_call_operand.vmem [shape: f32[256,128], index: 3, kind: input, shape index: {}]
  %s4 = inlined_call_operand.vmem [shape: f32[1,128], index: 4, kind: input, shape index: {}]
  %s5 = inlined_call_operand.vmem [shape: f32[128,128], index: 5, kind: output, shape index: {}]
  %s6 = sld [smem:[#allocation0]]
  $region38: #{sage_forward.2} parent=0
    _
  %s8 = ssub.s32 1, %s6
  %s9 = scalar_select 0, %s8, %s6
  // Predicated region
  $region2: #{sage_forward.2} parent=0 // pred_check
    _
  $region3: #{sage_forward.2} parent=0 // pred_check_branch
    %11 = sbr.rel (0) target = $region5
  $region4: #{sage_forward.2} parent=0 // pred_region
    _
  $region5: #{sage_forward.2} parent=0 // pred_fallthru
    _
  // Predicated region
  $region6: #{sage_forward.2} parent=0 // pred_check
    _
  $region7: #{sage_forward.2} parent=0 // pred_check_branch
    %13 = sbr.rel (0) target = $region9
  $region8: #{sage_forward.2} parent=0 // pred_region
    _
  $region9: #{sage_forward.2} parent=0 // pred_fallthru
    _
  // Predicated region
  $region10: #{sage_forward.2} parent=0 // pred_check
    _
  $region11: #{sage_forward.2} parent=0 // pred_check_branch
    %15 = sbr.rel (0) target = $region13
  $region12: #{sage_forward.2} parent=0 // pred_region
    _
  $region13: #{sage_forward.2} parent=0 // pred_fallthru
    _
  // Predicated region
  $region14: #{sage_forward.2} parent=0 // pred_check
    _
  $region15: #{sage_forward.2} parent=0 // pred_check_branch
    %17 = sbr.rel (0) target = $region17
  $region16: #{sage_forward.2} parent=0 // pred_region
    _
  $region17: #{sage_forward.2} parent=0 // pred_fallthru
    _
  // Predicated region
  $region18: #{sage_forward.2} parent=0 // pred_check
    _
  $region19: #{sage_forward.2} parent=0 // pred_check_branch
    %19 = sbr.rel (0) target = $region21
  $region20: #{sage_forward.2} parent=0 // pred_region
    _
  $region21: #{sage_forward.2} parent=0 // pred_fallthru
    _
  %p21 = scmp.eq.s32.totalorder 0, 0
  // Predicated region
  $region22: #{sage_forward.2} parent=0 // pred_check
    %p22 = pneg %p21
  $region23: #{sage_forward.2} parent=0 // pred_check_branch
    %24 = sbr.rel (%p22) target = $region25
  $region24: #{sage_forward.2} parent=0 // pred_region
    %25 = vst [vmem:[#allocation2] sm:$0xff] 0.0
    %26 = vst [vmem:[#allocation2 + $0x8] sm:$0xff] 0.0
    %27 = vst [vmem:[#allocation2 + $0x10] sm:$0xff] 0.0
    %28 = vst [vmem:[#allocation2 + $0x18] sm:$0xff] 0.0
    %29 = vst [vmem:[#allocation2 + $0x20] sm:$0xff] 0.0
    %30 = vst [vmem:[#allocation2 + $0x28] sm:$0xff] 0.0
    %31 = vst [vmem:[#allocation2 + $0x30] sm:$0xff] 0.0
    %32 = vst [vmem:[#allocation2 + $0x38] sm:$0xff] 0.0
    %33 = vst [vmem:[#allocation2 + $0x40] sm:$0xff] 0.0
    %34 = vst [vmem:[#allocation2 + $0x48] sm:$0xff] 0.0
    %35 = vst [vmem:[#allocation2 + $0x50] sm:$0xff] 0.0
    %36 = vst [vmem:[#allocation2 + $0x58] sm:$0xff] 0.0
    %37 = vst [vmem:[#allocation2 + $0x60] sm:$0xff] 0.0
    %38 = vst [vmem:[#allocation2 + $0x68] sm:$0xff] 0.0
    %39 = vst [vmem:[#allocation2 + $0x70] sm:$0xff] 0.0
    %40 = vst [vmem:[#allocation2 + $0x78] sm:$0xff] 0.0
    %vm41 = vcmask 7168
    %42 = vst.msk [vmem:[#allocation3] sm:$0xff] %vm41, 0.0
    %43 = vst.msk [vmem:[#allocation3 + $0x8] sm:$0xff] %vm41, 0.0
    %44 = vst.msk [vmem:[#allocation3 + $0x10] sm:$0xff] %vm41, 0.0
    %45 = vst.msk [vmem:[#allocation3 + $0x18] sm:$0xff] %vm41, 0.0
    %46 = vst.msk [vmem:[#allocation3 + $0x20] sm:$0xff] %vm41, 0.0
    %47 = vst.msk [vmem:[#allocation3 + $0x28] sm:$0xff] %vm41, 0.0
    %48 = vst.msk [vmem:[#allocation3 + $0x30] sm:$0xff] %vm41, 0.0
    %49 = vst.msk [vmem:[#allocation3 + $0x38] sm:$0xff] %vm41, 0.0
    %50 = vst.msk [vmem:[#allocation3 + $0x40] sm:$0xff] %vm41, 0.0
    %51 = vst.msk [vmem:[#allocation3 + $0x48] sm:$0xff] %vm41, 0.0
    %52 = vst.msk [vmem:[#allocation3 + $0x50] sm:$0xff] %vm41, 0.0
    %53 = vst.msk [vmem:[#allocation3 + $0x58] sm:$0xff] %vm41, 0.0
    %54 = vst.msk [vmem:[#allocation3 + $0x60] sm:$0xff] %vm41, 0.0
    %55 = vst.msk [vmem:[#allocation3 + $0x68] sm:$0xff] %vm41, 0.0
    %56 = vst.msk [vmem:[#allocation3 + $0x70] sm:$0xff] %vm41, 0.0
    %57 = vst.msk [vmem:[#allocation3 + $0x78] sm:$0xff] %vm41, 0.0
  $region25: #{sage_forward.2} parent=0 // pred_fallthru
    _
  %v58 = vld [vmem:[%s0] sm:$0xf]
  %v59 = vld [vmem:[%s0 + $0x4] sm:$0xf]
  %v60 = vld [vmem:[%s0 + $0x8] sm:$0xf]
  %v61 = vld [vmem:[%s0 + $0xc] sm:$0xf]
  %v62 = vld [vmem:[%s0 + $0x10] sm:$0xf]
  %v63 = vld [vmem:[%s0 + $0x14] sm:$0xf]
  %v64 = vld [vmem:[%s0 + $0x18] sm:$0xf]
  %v65 = vld [vmem:[%s0 + $0x1c] sm:$0xf]
  %v66 = vld [vmem:[%s0 + $0x20] sm:$0xf]
  %v67 = vld [vmem:[%s0 + $0x24] sm:$0xf]
  %v68 = vld [vmem:[%s0 + $0x28] sm:$0xf]
  %v69 = vld [vmem:[%s0 + $0x2c] sm:$0xf]
  %v70 = vld [vmem:[%s0 + $0x30] sm:$0xf]
  %v71 = vld [vmem:[%s0 + $0x34] sm:$0xf]
  %v72 = vld [vmem:[%s0 + $0x38] sm:$0xf]
  %v73 = vld [vmem:[%s0 + $0x3c] sm:$0xf]
  %v74 = vld [vmem:[#allocation2] sm:$0xff]
  %v75 = vld [vmem:[#allocation2 + $0x8] sm:$0xff]
  %v76 = vld [vmem:[#allocation2 + $0x10] sm:$0xff]
  %v77 = vld [vmem:[#allocation2 + $0x18] sm:$0xff]
  %v78 = vld [vmem:[#allocation2 + $0x20] sm:$0xff]
  %v79 = vld [vmem:[#allocation2 + $0x28] sm:$0xff]
  %v80 = vld [vmem:[#allocation2 + $0x30] sm:$0xff]
  %v81 = vld [vmem:[#allocation2 + $0x38] sm:$0xff]
  %v82 = vld [vmem:[#allocation2 + $0x40] sm:$0xff]
  %v83 = vld [vmem:[#allocation2 + $0x48] sm:$0xff]
  %v84 = vld [vmem:[#allocation2 + $0x50] sm:$0xff]
  %v85 = vld [vmem:[#allocation2 + $0x58] sm:$0xff]
  %v86 = vld [vmem:[#allocation2 + $0x60] sm:$0xff]
  %v87 = vld [vmem:[#allocation2 + $0x68] sm:$0xff]
  %v88 = vld [vmem:[#allocation2 + $0x70] sm:$0xff]
  %v89 = vld [vmem:[#allocation2 + $0x78] sm:$0xff]
  %v90 = vld [vmem:[%s1] sm:$0xf]
  %v91 = vld [vmem:[%s1 + $0x4] sm:$0xf]
  %v92 = vld [vmem:[%s1 + $0x8] sm:$0xf]
  %v93 = vld [vmem:[%s1 + $0xc] sm:$0xf]
  %v94 = vld [vmem:[%s1 + $0x10] sm:$0xf]
  %v95 = vld [vmem:[%s1 + $0x14] sm:$0xf]
  %v96 = vld [vmem:[%s1 + $0x18] sm:$0xf]
  %v97 = vld [vmem:[%s1 + $0x1c] sm:$0xf]
  %v98 = vld [vmem:[%s1 + $0x20] sm:$0xf]
  %v99 = vld [vmem:[%s1 + $0x24] sm:$0xf]
  %v100 = vld [vmem:[%s1 + $0x28] sm:$0xf]
  %v101 = vld [vmem:[%s1 + $0x2c] sm:$0xf]
  %v102 = vld [vmem:[%s1 + $0x30] sm:$0xf]
  %v103 = vld [vmem:[%s1 + $0x34] sm:$0xf]
  %v104 = vld [vmem:[%s1 + $0x38] sm:$0xf]
  %v105 = vld [vmem:[%s1 + $0x3c] sm:$0xf]
  %v122 = vunpack.c.l.b16 %v58
  %v123 = vunpack.c.l.b16 %v59
  %v124 = vunpack.c.l.b16 %v60
  %v125 = vunpack.c.l.b16 %v61
  %v126 = vunpack.c.l.b16 %v62
  %v127 = vunpack.c.l.b16 %v63
  %v128 = vunpack.c.l.b16 %v64
  %v129 = vunpack.c.l.b16 %v65
  %v130 = vunpack.c.l.b16 %v66
  %v131 = vunpack.c.l.b16 %v67
  %v132 = vunpack.c.l.b16 %v68
  %v133 = vunpack.c.l.b16 %v69
  %v134 = vunpack.c.l.b16 %v70
  %v135 = vunpack.c.l.b16 %v71
  %v136 = vunpack.c.l.b16 %v72
  %v137 = vunpack.c.l.b16 %v73
  %v138 = vpack.c.b16 %v123, %v122
  %v139 = vpack.c.b16 %v125, %v124
  %v140 = vpack.c.b16 %v127, %v126
  %v141 = vpack.c.b16 %v129, %v128
  %v142 = vpack.c.b16 %v131, %v130
  %v143 = vpack.c.b16 %v133, %v132
  %v144 = vpack.c.b16 %v135, %v134
  %v145 = vpack.c.b16 %v137, %v136
  %v170 = vunpack.c.l.b16 %v90
  %v171 = vunpack.c.l.b16 %v91
  %v172 = vunpack.c.l.b16 %v92
  %v173 = vunpack.c.l.b16 %v93
  %v174 = vunpack.c.l.b16 %v94
  %v175 = vunpack.c.l.b16 %v95
  %v176 = vunpack.c.l.b16 %v96
  %v177 = vunpack.c.l.b16 %v97
  %v178 = vunpack.c.l.b16 %v98
  %v179 = vunpack.c.l.b16 %v99
  %v180 = vunpack.c.l.b16 %v100
  %v181 = vunpack.c.l.b16 %v101
  %v182 = vunpack.c.l.b16 %v102
  %v183 = vunpack.c.l.b16 %v103
  %v184 = vunpack.c.l.b16 %v104
  %v185 = vunpack.c.l.b16 %v105
  %v186 = vpack.c.b16 %v171, %v170
  %v187 = vpack.c.b16 %v173, %v172
  %v188 = vpack.c.b16 %v175, %v174
  %v189 = vpack.c.b16 %v177, %v176
  %v190 = vpack.c.b16 %v179, %v178
  %v191 = vpack.c.b16 %v181, %v180
  %v192 = vpack.c.b16 %v183, %v182
  %v193 = vpack.c.b16 %v185, %v184
  %202 = vmatprep.subr.bf16.mxu0 0
  %203 = vmatpush1.bf16.msra.mxu0 %v186
  %204 = vmatprep.subr.bf16.mxu0 0
  %205 = vmatpush1.bf16.msra.mxu0 %v187
  %206 = vmatprep.subr.bf16.mxu0 0
  %207 = vmatpush1.bf16.msra.mxu0 %v188
  %208 = vmatprep.subr.bf16.mxu0 0
  %209 = vmatpush1.bf16.msra.mxu0 %v189
  %210 = vmatprep.subr.bf16.mxu0 0
  %211 = vmatpush1.bf16.msra.mxu0 %v190
  %212 = vmatprep.subr.bf16.mxu0 0
  %213 = vmatpush1.bf16.msra.mxu0 %v191
  %214 = vmatprep.subr.bf16.mxu0 0
  %215 = vmatpush1.bf16.msra.mxu0 %v192
  %216 = vmatprep.subr.bf16.mxu0 0
  %217 = vmatpush1.bf16.msra.mxu0 %v193
  %218 = vmatprep.subr.bf16.mxu0 0
  %219 = vmatpush1.bf16.msra.mxu0 0
  %220 = vmatprep.subr.bf16.mxu0 0
  %221 = vmatpush1.bf16.msra.mxu0 0
  %222 = vmatprep.subr.bf16.mxu0 0
  %223 = vmatpush1.bf16.msra.mxu0 0
  %224 = vmatprep.subr.bf16.mxu0 0
  %225 = vmatpush1.bf16.msra.mxu0 0
  %226 = vmatprep.subr.bf16.mxu0 0
  %227 = vmatpush1.bf16.msra.mxu0 0
  %228 = vmatprep.subr.bf16.mxu0 0
  %229 = vmatpush1.bf16.msra.mxu0 0
  %230 = vmatprep.subr.bf16.mxu0 0
  %231 = vmatpush1.bf16.msra.mxu0 0
  %232 = vmatprep.subr.bf16.mxu0 0
  %233 = vmatpush1.bf16.msra.mxu0 0
  %234 = vmatprep.mubr.bf16.mxu0 0
  %235 = vmatmul.mubr.bf16.gmra.mrb[0].mxu0 %v138
  %v236 = vpop.f32.mrb[0].mxu0
  %v237 = vadd.f32 0.0, %v236
  %v238 = vpop.f32.mrb[0].mxu0
  %v239 = vpop.f32.mrb[0].mxu0
  %v240 = vadd.f32 0.0, %v239
  %v241 = vpop.f32.mrb[0].mxu0
  %242 = vmatprep.mubr.bf16.mxu0 0
  %243 = vmatmul.mubr.bf16.gmra.mrb[0].mxu0 %v139
  %v244 = vpop.f32.mrb[0].mxu0
  %v245 = vadd.f32 0.0, %v244
  %v246 = vpop.f32.mrb[0].mxu0
  %v247 = vpop.f32.mrb[0].mxu0
  %v248 = vadd.f32 0.0, %v247
  %v249 = vpop.f32.mrb[0].mxu0
  %250 = vmatprep.mubr.bf16.mxu0 0
  %251 = vmatmul.mubr.bf16.gmra.mrb[0].mxu0 %v140
  %v252 = vpop.f32.mrb[0].mxu0
  %v253 = vadd.f32 0.0, %v252
  %v254 = vpop.f32.mrb[0].mxu0
  %v255 = vpop.f32.mrb[0].mxu0
  %v256 = vadd.f32 0.0, %v255
  %v257 = vpop.f32.mrb[0].mxu0
  %258 = vmatprep.mubr.bf16.mxu0 0
  %259 = vmatmul.mubr.bf16.gmra.mrb[0].mxu0 %v141
  %v260 = vpop.f32.mrb[0].mxu0
  %v261 = vadd.f32 0.0, %v260
  %v262 = vpop.f32.mrb[0].mxu0
  %v263 = vpop.f32.mrb[0].mxu0
  %v264 = vadd.f32 0.0, %v263
  %v265 = vpop.f32.mrb[0].mxu0
  %266 = vmatprep.mubr.bf16.mxu0 0
  %267 = vmatmul.mubr.bf16.gmra.mrb[0].mxu0 %v142
  %v268 = vpop.f32.mrb[0].mxu0
  %v269 = vadd.f32 0.0, %v268
  %v270 = vpop.f32.mrb[0].mxu0
  %v271 = vpop.f32.mrb[0].mxu0
  %v272 = vadd.f32 0.0, %v271
  %v273 = vpop.f32.mrb[0].mxu0
  %274 = vmatprep.mubr.bf16.mxu0 0
  %275 = vmatmul.mubr.bf16.gmra.mrb[0].mxu0 %v143
  %v276 = vpop.f32.mrb[0].mxu0
  %v277 = vadd.f32 0.0, %v276
  %v278 = vpop.f32.mrb[0].mxu0
  %v279 = vpop.f32.mrb[0].mxu0
  %v280 = vadd.f32 0.0, %v279
  %v281 = vpop.f32.mrb[0].mxu0
  %282 = vmatprep.mubr.bf16.mxu0 0
  %283 = vmatmul.mubr.bf16.gmra.mrb[0].mxu0 %v144
  %v284 = vpop.f32.mrb[0].mxu0
  %v285 = vadd.f32 0.0, %v284
  %v286 = vpop.f32.mrb[0].mxu0
  %v287 = vpop.f32.mrb[0].mxu0
  %v288 = vadd.f32 0.0, %v287
  %v289 = vpop.f32.mrb[0].mxu0
  %290 = vmatprep.mubr.bf16.mxu0 0
  %291 = vmatmul.mubr.bf16.gmra.mrb[0].mxu0 %v145
  %v292 = vpop.f32.mrb[0].mxu0
  %v293 = vadd.f32 0.0, %v292
  %v294 = vpop.f32.mrb[0].mxu0
  %v295 = vpop.f32.mrb[0].mxu0
  %v296 = vadd.f32 0.0, %v295
  %v297 = vpop.f32.mrb[0].mxu0
  %298 = vdwg.mxu0
  %v299 = vadd.f32 %v74, %v237
  %v300 = vadd.f32 %v75, %v240
  %v301 = vadd.f32 %v76, %v245
  %v302 = vadd.f32 %v77, %v248
  %v303 = vadd.f32 %v78, %v253
  %v304 = vadd.f32 %v79, %v256
  %v305 = vadd.f32 %v80, %v261
  %v306 = vadd.f32 %v81, %v264
  %v307 = vadd.f32 %v82, %v269
  %v308 = vadd.f32 %v83, %v272
  %v309 = vadd.f32 %v84, %v277
  %v310 = vadd.f32 %v85, %v280
  %v311 = vadd.f32 %v86, %v285
  %v312 = vadd.f32 %v87, %v288
  %v313 = vadd.f32 %v88, %v293
  %v314 = vadd.f32 %v89, %v296
  %315 = vst [vmem:[#allocation2] sm:$0xff] %v299
  %316 = vst [vmem:[#allocation2 + $0x8] sm:$0xff] %v300
  %317 = vst [vmem:[#allocation2 + $0x10] sm:$0xff] %v301
  %318 = vst [vmem:[#allocation2 + $0x18] sm:$0xff] %v302
  %319 = vst [vmem:[#allocation2 + $0x20] sm:$0xff] %v303
  %320 = vst [vmem:[#allocation2 + $0x28] sm:$0xff] %v304
  %321 = vst [vmem:[#allocation2 + $0x30] sm:$0xff] %v305
  %322 = vst [vmem:[#allocation2 + $0x38] sm:$0xff] %v306
  %323 = vst [vmem:[#allocation2 + $0x40] sm:$0xff] %v307
  %324 = vst [vmem:[#allocation2 + $0x48] sm:$0xff] %v308
  %325 = vst [vmem:[#allocation2 + $0x50] sm:$0xff] %v309
  %326 = vst [vmem:[#allocation2 + $0x58] sm:$0xff] %v310
  %327 = vst [vmem:[#allocation2 + $0x60] sm:$0xff] %v311
  %328 = vst [vmem:[#allocation2 + $0x68] sm:$0xff] %v312
  %329 = vst [vmem:[#allocation2 + $0x70] sm:$0xff] %v313
  %330 = vst [vmem:[#allocation2 + $0x78] sm:$0xff] %v314
  %v331 = vld [vmem:[#allocation3] sm:$0xff]
  %v332 = vld [vmem:[#allocation3 + $0x8] sm:$0xff]
  %v333 = vld [vmem:[#allocation3 + $0x10] sm:$0xff]
  %v334 = vld [vmem:[#allocation3 + $0x18] sm:$0xff]
  %v335 = vld [vmem:[#allocation3 + $0x20] sm:$0xff]
  %v336 = vld [vmem:[#allocation3 + $0x28] sm:$0xff]
  %v337 = vld [vmem:[#allocation3 + $0x30] sm:$0xff]
  %v338 = vld [vmem:[#allocation3 + $0x38] sm:$0xff]
  %v339 = vld [vmem:[#allocation3 + $0x40] sm:$0xff]
  %v340 = vld [vmem:[#allocation3 + $0x48] sm:$0xff]
  %v341 = vld [vmem:[#allocation3 + $0x50] sm:$0xff]
  %v342 = vld [vmem:[#allocation3 + $0x58] sm:$0xff]
  %v343 = vld [vmem:[#allocation3 + $0x60] sm:$0xff]
  %v344 = vld [vmem:[#allocation3 + $0x68] sm:$0xff]
  %v345 = vld [vmem:[#allocation3 + $0x70] sm:$0xff]
  %v346 = vld [vmem:[#allocation3 + $0x78] sm:$0xff]
  %v347 = vunpack.c.l.bf16 %v58
  %v348 = vunpack.c.l.bf16 %v59
  %v349 = vunpack.c.l.bf16 %v60
  %v350 = vunpack.c.l.bf16 %v61
  %v351 = vunpack.c.l.bf16 %v62
  %v352 = vunpack.c.l.bf16 %v63
  %v353 = vunpack.c.l.bf16 %v64
  %v354 = vunpack.c.l.bf16 %v65
  %v355 = vunpack.c.l.bf16 %v66
  %v356 = vunpack.c.l.bf16 %v67
  %v357 = vunpack.c.l.bf16 %v68
  %v358 = vunpack.c.l.bf16 %v69
  %v359 = vunpack.c.l.bf16 %v70
  %v360 = vunpack.c.l.bf16 %v71
  %v361 = vunpack.c.l.bf16 %v72
  %v362 = vunpack.c.l.bf16 %v73
  %363 = vadd.xlane.f32.xlu0 %v347
  %v364 = vpop.xlane.xlu0 %363
  %365 = vadd.xlane.f32.xlu0 %v348
  %v366 = vpop.xlane.xlu0 %365
  %367 = vadd.xlane.f32.xlu0 %v349
  %v368 = vpop.xlane.xlu0 %367
  %369 = vadd.xlane.f32.xlu0 %v350
  %v370 = vpop.xlane.xlu0 %369
  %371 = vadd.xlane.f32.xlu0 %v351
  %v372 = vpop.xlane.xlu0 %371
  %373 = vadd.xlane.f32.xlu0 %v352
  %v374 = vpop.xlane.xlu0 %373
  %375 = vadd.xlane.f32.xlu0 %v353
  %v376 = vpop.xlane.xlu0 %375
  %377 = vadd.xlane.f32.xlu0 %v354
  %v378 = vpop.xlane.xlu0 %377
  %379 = vadd.xlane.f32.xlu0 %v355
  %v380 = vpop.xlane.xlu0 %379
  %381 = vadd.xlane.f32.xlu0 %v356
  %v382 = vpop.xlane.xlu0 %381
  %383 = vadd.xlane.f32.xlu0 %v357
  %v384 = vpop.xlane.xlu0 %383
  %385 = vadd.xlane.f32.xlu0 %v358
  %v386 = vpop.xlane.xlu0 %385
  %387 = vadd.xlane.f32.xlu0 %v359
  %v388 = vpop.xlane.xlu0 %387
  %389 = vadd.xlane.f32.xlu0 %v360
  %v390 = vpop.xlane.xlu0 %389
  %391 = vadd.xlane.f32.xlu0 %v361
  %v392 = vpop.xlane.xlu0 %391
  %393 = vadd.xlane.f32.xlu0 %v362
  %v394 = vpop.xlane.xlu0 %393
  %v395 = vadd.f32 %v331, %v364
  %v396 = vadd.f32 %v332, %v366
  %v397 = vadd.f32 %v333, %v368
  %v398 = vadd.f32 %v334, %v370
  %v399 = vadd.f32 %v335, %v372
  %v400 = vadd.f32 %v336, %v374
  %v401 = vadd.f32 %v337, %v376
  %v402 = vadd.f32 %v338, %v378
  %v403 = vadd.f32 %v339, %v380
  %v404 = vadd.f32 %v340, %v382
  %v405 = vadd.f32 %v341, %v384
  %v406 = vadd.f32 %v342, %v386
  %v407 = vadd.f32 %v343, %v388
  %v408 = vadd.f32 %v344, %v390
  %v409 = vadd.f32 %v345, %v392
  %v410 = vadd.f32 %v346, %v394
  %vm411 = vcmask 7168
  %412 = vst.msk [vmem:[#allocation3] sm:$0xff] %vm411, %v395
  %413 = vst.msk [vmem:[#allocation3 + $0x8] sm:$0xff] %vm411, %v396
  %414 = vst.msk [vmem:[#allocation3 + $0x10] sm:$0xff] %vm411, %v397
  %415 = vst.msk [vmem:[#allocation3 + $0x18] sm:$0xff] %vm411, %v398
  %416 = vst.msk [vmem:[#allocation3 + $0x20] sm:$0xff] %vm411, %v399
  %417 = vst.msk [vmem:[#allocation3 + $0x28] sm:$0xff] %vm411, %v400
  %418 = vst.msk [vmem:[#allocation3 + $0x30] sm:$0xff] %vm411, %v401
  %419 = vst.msk [vmem:[#allocation3 + $0x38] sm:$0xff] %vm411, %v402
  %420 = vst.msk [vmem:[#allocation3 + $0x40] sm:$0xff] %vm411, %v403
  %421 = vst.msk [vmem:[#allocation3 + $0x48] sm:$0xff] %vm411, %v404
  %422 = vst.msk [vmem:[#allocation3 + $0x50] sm:$0xff] %vm411, %v405
  %423 = vst.msk [vmem:[#allocation3 + $0x58] sm:$0xff] %vm411, %v406
  %424 = vst.msk [vmem:[#allocation3 + $0x60] sm:$0xff] %vm411, %v407
  %425 = vst.msk [vmem:[#allocation3 + $0x68] sm:$0xff] %vm411, %v408
  %426 = vst.msk [vmem:[#allocation3 + $0x70] sm:$0xff] %vm411, %v409
  %427 = vst.msk [vmem:[#allocation3 + $0x78] sm:$0xff] %vm411, %v410
  // Predicated region
  $region26: #{sage_forward.2} parent=0 // pred_check
    %p428 = pneg %p21
  $region27: #{sage_forward.2} parent=0 // pred_check_branch
    %430 = sbr.rel (%p428) target = $region29
  $region28: #{sage_forward.2} parent=0 // pred_region
    %v431 = vld [vmem:[#allocation3] sm:$0xff]
    %v432 = vld [vmem:[#allocation3 + $0x8] sm:$0xff]
    %v433 = vld [vmem:[#allocation3 + $0x10] sm:$0xff]
    %v434 = vld [vmem:[#allocation3 + $0x18] sm:$0xff]
    %v435 = vld [vmem:[#allocation3 + $0x20] sm:$0xff]
    %v436 = vld [vmem:[#allocation3 + $0x28] sm:$0xff]
    %v437 = vld [vmem:[#allocation3 + $0x30] sm:$0xff]
    %v438 = vld [vmem:[#allocation3 + $0x38] sm:$0xff]
    %v439 = vld [vmem:[#allocation3 + $0x40] sm:$0xff]
    %v440 = vld [vmem:[#allocation3 + $0x48] sm:$0xff]
    %v441 = vld [vmem:[#allocation3 + $0x50] sm:$0xff]
    %v442 = vld [vmem:[#allocation3 + $0x58] sm:$0xff]
    %v443 = vld [vmem:[#allocation3 + $0x60] sm:$0xff]
    %v444 = vld [vmem:[#allocation3 + $0x68] sm:$0xff]
    %v445 = vld [vmem:[#allocation3 + $0x70] sm:$0xff]
    %v446 = vld [vmem:[#allocation3 + $0x78] sm:$0xff]
    %v447 = vmax.f32 %v431, 1.0
    %v448 = vmax.f32 %v432, 1.0
    %v449 = vmax.f32 %v433, 1.0
    %v450 = vmax.f32 %v434, 1.0
    %v451 = vmax.f32 %v435, 1.0
    %v452 = vmax.f32 %v436, 1.0
    %v453 = vmax.f32 %v437, 1.0
    %v454 = vmax.f32 %v438, 1.0
    %v455 = vmax.f32 %v439, 1.0
    %v456 = vmax.f32 %v440, 1.0
    %v457 = vmax.f32 %v441, 1.0
    %v458 = vmax.f32 %v442, 1.0
    %v459 = vmax.f32 %v443, 1.0
    %v460 = vmax.f32 %v444, 1.0
    %v461 = vmax.f32 %v445, 1.0
    %v462 = vmax.f32 %v446, 1.0
    %v463 = vrcp.pop %v447
    %v464 = vmul.f32 1.0, %v463
    %v465 = vrcp.pop %v448
    %v466 = vmul.f32 1.0, %v465
    %v467 = vrcp.pop %v449
    %v468 = vmul.f32 1.0, %v467
    %v469 = vrcp.pop %v450
    %v470 = vmul.f32 1.0, %v469
    %v471 = vrcp.pop %v451
    %v472 = vmul.f32 1.0, %v471
    %v473 = vrcp.pop %v452
    %v474 = vmul.f32 1.0, %v473
    %v475 = vrcp.pop %v453
    %v476 = vmul.f32 1.0, %v475
    %v477 = vrcp.pop %v454
    %v478 = vmul.f32 1.0, %v477
    %v479 = vrcp.pop %v455
    %v480 = vmul.f32 1.0, %v479
    %v481 = vrcp.pop %v456
    %v482 = vmul.f32 1.0, %v481
    %v483 = vrcp.pop %v457
    %v484 = vmul.f32 1.0, %v483
    %v485 = vrcp.pop %v458
    %v486 = vmul.f32 1.0, %v485
    %v487 = vrcp.pop %v459
    %v488 = vmul.f32 1.0, %v487
    %v489 = vrcp.pop %v460
    %v490 = vmul.f32 1.0, %v489
    %v491 = vrcp.pop %v461
    %v492 = vmul.f32 1.0, %v491
    %v493 = vrcp.pop %v462
    %v494 = vmul.f32 1.0, %v493
    %v495 = vld [vmem:[%s2] sm:$0xff]
    %v496 = vld [vmem:[%s2 + $0x8] sm:$0xff]
    %v497 = vld [vmem:[%s2 + $0x10] sm:$0xff]
    %v498 = vld [vmem:[%s2 + $0x18] sm:$0xff]
    %v499 = vld [vmem:[%s2 + $0x20] sm:$0xff]
    %v500 = vld [vmem:[%s2 + $0x28] sm:$0xff]
    %v501 = vld [vmem:[%s2 + $0x30] sm:$0xff]
    %v502 = vld [vmem:[%s2 + $0x38] sm:$0xff]
    %v503 = vld [vmem:[%s2 + $0x40] sm:$0xff]
    %v504 = vld [vmem:[%s2 + $0x48] sm:$0xff]
    %v505 = vld [vmem:[%s2 + $0x50] sm:$0xff]
    %v506 = vld [vmem:[%s2 + $0x58] sm:$0xff]
    %v507 = vld [vmem:[%s2 + $0x60] sm:$0xff]
    %v508 = vld [vmem:[%s2 + $0x68] sm:$0xff]
    %v509 = vld [vmem:[%s2 + $0x70] sm:$0xff]
    %v510 = vld [vmem:[%s2 + $0x78] sm:$0xff]
    %v511 = vld [vmem:[%s2 + $0x80] sm:$0xff]
    %v512 = vld [vmem:[%s2 + $0x88] sm:$0xff]
    %v513 = vld [vmem:[%s2 + $0x90] sm:$0xff]
    %v514 = vld [vmem:[%s2 + $0x98] sm:$0xff]
    %v515 = vld [vmem:[%s2 + $0xa0] sm:$0xff]
    %v516 = vld [vmem:[%s2 + $0xa8] sm:$0xff]
    %v517 = vld [vmem:[%s2 + $0xb0] sm:$0xff]
    %v518 = vld [vmem:[%s2 + $0xb8] sm:$0xff]
    %v519 = vld [vmem:[%s2 + $0xc0] sm:$0xff]
    %v520 = vld [vmem:[%s2 + $0xc8] sm:$0xff]
    %v521 = vld [vmem:[%s2 + $0xd0] sm:$0xff]
    %v522 = vld [vmem:[%s2 + $0xd8] sm:$0xff]
    %v523 = vld [vmem:[%s2 + $0xe0] sm:$0xff]
    %v524 = vld [vmem:[%s2 + $0xe8] sm:$0xff]
    %v525 = vld [vmem:[%s2 + $0xf0] sm:$0xff]
    %v526 = vld [vmem:[%s2 + $0xf8] sm:$0xff]
    %v527 = vld [vmem:[%s3] sm:$0xff]
    %v528 = vld [vmem:[%s3 + $0x8] sm:$0xff]
    %v529 = vld [vmem:[%s3 + $0x10] sm:$0xff]
    %v530 = vld [vmem:[%s3 + $0x18] sm:$0xff]
    %v531 = vld [vmem:[%s3 + $0x20] sm:$0xff]
    %v532 = vld [vmem:[%s3 + $0x28] sm:$0xff]
    %v533 = vld [vmem:[%s3 + $0x30] sm:$0xff]
    %v534 = vld [vmem:[%s3 + $0x38] sm:$0xff]
    %v535 = vld [vmem:[%s3 + $0x40] sm:$0xff]
    %v536 = vld [vmem:[%s3 + $0x48] sm:$0xff]
    %v537 = vld [vmem:[%s3 + $0x50] sm:$0xff]
    %v538 = vld [vmem:[%s3 + $0x58] sm:$0xff]
    %v539 = vld [vmem:[%s3 + $0x60] sm:$0xff]
    %v540 = vld [vmem:[%s3 + $0x68] sm:$0xff]
    %v541 = vld [vmem:[%s3 + $0x70] sm:$0xff]
    %v542 = vld [vmem:[%s3 + $0x78] sm:$0xff]
    %v543 = vld [vmem:[%s3 + $0x80] sm:$0xff]
    %v544 = vld [vmem:[%s3 + $0x88] sm:$0xff]
    %v545 = vld [vmem:[%s3 + $0x90] sm:$0xff]
    %v546 = vld [vmem:[%s3 + $0x98] sm:$0xff]
    %v547 = vld [vmem:[%s3 + $0xa0] sm:$0xff]
    %v548 = vld [vmem:[%s3 + $0xa8] sm:$0xff]
    %v549 = vld [vmem:[%s3 + $0xb0] sm:$0xff]
    %v550 = vld [vmem:[%s3 + $0xb8] sm:$0xff]
    %v551 = vld [vmem:[%s3 + $0xc0] sm:$0xff]
    %v552 = vld [vmem:[%s3 + $0xc8] sm:$0xff]
    %v553 = vld [vmem:[%s3 + $0xd0] sm:$0xff]
    %v554 = vld [vmem:[%s3 + $0xd8] sm:$0xff]
    %v555 = vld [vmem:[%s3 + $0xe0] sm:$0xff]
    %v556 = vld [vmem:[%s3 + $0xe8] sm:$0xff]
    %v557 = vld [vmem:[%s3 + $0xf0] sm:$0xff]
    %v558 = vld [vmem:[%s3 + $0xf8] sm:$0xff]
    %v559 = vld [vmem:[#allocation2] sm:$0xff]
    %v560 = vld [vmem:[#allocation2 + $0x8] sm:$0xff]
    %v561 = vld [vmem:[#allocation2 + $0x10] sm:$0xff]
    %v562 = vld [vmem:[#allocation2 + $0x18] sm:$0xff]
    %v563 = vld [vmem:[#allocation2 + $0x20] sm:$0xff]
    %v564 = vld [vmem:[#allocation2 + $0x28] sm:$0xff]
    %v565 = vld [vmem:[#allocation2 + $0x30] sm:$0xff]
    %v566 = vld [vmem:[#allocation2 + $0x38] sm:$0xff]
    %v567 = vld [vmem:[#allocation2 + $0x40] sm:$0xff]
    %v568 = vld [vmem:[#allocation2 + $0x48] sm:$0xff]
    %v569 = vld [vmem:[#allocation2 + $0x50] sm:$0xff]
    %v570 = vld [vmem:[#allocation2 + $0x58] sm:$0xff]
    %v571 = vld [vmem:[#allocation2 + $0x60] sm:$0xff]
    %v572 = vld [vmem:[#allocation2 + $0x68] sm:$0xff]
    %v573 = vld [vmem:[#allocation2 + $0x70] sm:$0xff]
    %v574 = vld [vmem:[#allocation2 + $0x78] sm:$0xff]
    %576 = vset.pattern.permute.xlu0 0
    %577 = vperm.xlu0 %576, %v464
    %v578 = vpop.permute.xlu0 %577
    %581 = vset.pattern.permute.xlu0 0
    %582 = vperm.xlu0 %581, %v466
    %v583 = vpop.permute.xlu0 %582
    %586 = vset.pattern.permute.xlu0 0
    %587 = vperm.xlu0 %586, %v468
    %v588 = vpop.permute.xlu0 %587
    %591 = vset.pattern.permute.xlu0 0
    %592 = vperm.xlu0 %591, %v470
    %v593 = vpop.permute.xlu0 %592
    %596 = vset.pattern.permute.xlu0 0
    %597 = vperm.xlu0 %596, %v472
    %v598 = vpop.permute.xlu0 %597
    %601 = vset.pattern.permute.xlu0 0
    %602 = vperm.xlu0 %601, %v474
    %v603 = vpop.permute.xlu0 %602
    %606 = vset.pattern.permute.xlu0 0
    %607 = vperm.xlu0 %606, %v476
    %v608 = vpop.permute.xlu0 %607
    %611 = vset.pattern.permute.xlu0 0
    %612 = vperm.xlu0 %611, %v478
    %v613 = vpop.permute.xlu0 %612
    %616 = vset.pattern.permute.xlu0 0
    %617 = vperm.xlu0 %616, %v480
    %v618 = vpop.permute.xlu0 %617
    %621 = vset.pattern.permute.xlu0 0
    %622 = vperm.xlu0 %621, %v482
    %v623 = vpop.permute.xlu0 %622
    %626 = vset.pattern.permute.xlu0 0
    %627 = vperm.xlu0 %626, %v484
    %v628 = vpop.permute.xlu0 %627
    %631 = vset.pattern.permute.xlu0 0
    %632 = vperm.xlu0 %631, %v486
    %v633 = vpop.permute.xlu0 %632
    %636 = vset.pattern.permute.xlu0 0
    %637 = vperm.xlu0 %636, %v488
    %v638 = vpop.permute.xlu0 %637
    %641 = vset.pattern.permute.xlu0 0
    %642 = vperm.xlu0 %641, %v490
    %v643 = vpop.permute.xlu0 %642
    %646 = vset.pattern.permute.xlu0 0
    %647 = vperm.xlu0 %646, %v492
    %v648 = vpop.permute.xlu0 %647
    %651 = vset.pattern.permute.xlu0 0
    %652 = vperm.xlu0 %651, %v494
    %v653 = vpop.permute.xlu0 %652
    %v655 = vmul.f32 %v559, %v578
    %v656 = vmul.f32 %v560, %v583
    %v657 = vmul.f32 %v561, %v588
    %v658 = vmul.f32 %v562, %v593
    %v659 = vmul.f32 %v563, %v598
    %v660 = vmul.f32 %v564, %v603
    %v661 = vmul.f32 %v565, %v608
    %v662 = vmul.f32 %v566, %v613
    %v663 = vmul.f32 %v567, %v618
    %v664 = vmul.f32 %v568, %v623
    %v665 = vmul.f32 %v569, %v628
    %v666 = vmul.f32 %v570, %v633
    %v667 = vmul.f32 %v571, %v638
    %v668 = vmul.f32 %v572, %v643
    %v669 = vmul.f32 %v573, %v648
    %v670 = vmul.f32 %v574, %v653
    %671 = vmatprep.subr.mxu0 0.0
    %672 = vmatpush1.msra.mxu0 %v527
    %673 = vmatprep.subr.mxu0 0.0
    %674 = vmatpush1.msra.mxu0 %v528
    %675 = vmatprep.subr.mxu0 0.0
    %676 = vmatpush1.msra.mxu0 %v529
    %677 = vmatprep.subr.mxu0 0.0
    %678 = vmatpush1.msra.mxu0 %v530
    %679 = vmatprep.subr.mxu0 0.0
    %680 = vmatpush1.msra.mxu0 %v531
    %681 = vmatprep.subr.mxu0 0.0
    %682 = vmatpush1.msra.mxu0 %v532
    %683 = vmatprep.subr.mxu0 0.0
    %684 = vmatpush1.msra.mxu0 %v533
    %685 = vmatprep.subr.mxu0 0.0
    %686 = vmatpush1.msra.mxu0 %v534
    %687 = vmatprep.subr.mxu0 0.0
    %688 = vmatpush1.msra.mxu0 %v535
    %689 = vmatprep.subr.mxu0 0.0
    %690 = vmatpush1.msra.mxu0 %v536
    %691 = vmatprep.subr.mxu0 0.0
    %692 = vmatpush1.msra.mxu0 %v537
    %693 = vmatprep.subr.mxu0 0.0
    %694 = vmatpush1.msra.mxu0 %v538
    %695 = vmatprep.subr.mxu0 0.0
    %696 = vmatpush1.msra.mxu0 %v539
    %697 = vmatprep.subr.mxu0 0.0
    %698 = vmatpush1.msra.mxu0 %v540
    %699 = vmatprep.subr.mxu0 0.0
    %700 = vmatpush1.msra.mxu0 %v541
    %701 = vmatprep.subr.mxu0 0.0
    %702 = vmatpush1.msra.mxu0 %v542
    %703 = vmatprep.subr.mxu0 0.0
    %704 = vmatpush1.msra.mxu0 %v543
    %705 = vmatprep.subr.mxu0 0.0
    %706 = vmatpush1.msra.mxu0 %v544
    %707 = vmatprep.subr.mxu0 0.0
    %708 = vmatpush1.msra.mxu0 %v545
    %709 = vmatprep.subr.mxu0 0.0
    %710 = vmatpush1.msra.mxu0 %v546
    %711 = vmatprep.subr.mxu0 0.0
    %712 = vmatpush1.msra.mxu0 %v547
    %713 = vmatprep.subr.mxu0 0.0
    %714 = vmatpush1.msra.mxu0 %v548
    %715 = vmatprep.subr.mxu0 0.0
    %716 = vmatpush1.msra.mxu0 %v549
    %717 = vmatprep.subr.mxu0 0.0
    %718 = vmatpush1.msra.mxu0 %v550
    %719 = vmatprep.subr.mxu0 0.0
    %720 = vmatpush1.msra.mxu0 %v551
    %721 = vmatprep.subr.mxu0 0.0
    %722 = vmatpush1.msra.mxu0 %v552
    %723 = vmatprep.subr.mxu0 0.0
    %724 = vmatpush1.msra.mxu0 %v553
    %725 = vmatprep.subr.mxu0 0.0
    %726 = vmatpush1.msra.mxu0 %v554
    %727 = vmatprep.subr.mxu0 0.0
    %728 = vmatpush1.msra.mxu0 %v555
    %729 = vmatprep.subr.mxu0 0.0
    %730 = vmatpush1.msra.mxu0 %v556
    %731 = vmatprep.subr.mxu0 0.0
    %732 = vmatpush1.msra.mxu0 %v557
    %733 = vmatprep.subr.mxu0 0.0
    %734 = vmatpush1.msra.mxu0 %v558
    %735 = vmatprep.mubr.f32.mxu0 %v496
    %736 = vmatmul.mubr.f32.gmra.mrb[0].mxu0 %v495
    %v737 = vpop.f32.mrb[0].mxu0
    %v738 = vadd.f32 %v655, %v737
    %v739 = vpop.f32.mrb[0].mxu0
    %740 = vmatprep.mubr.f32.mxu0 %v498
    %741 = vmatmul.mubr.f32.gmra.mrb[0].mxu0 %v497
    %v742 = vpop.f32.mrb[0].mxu0
    %v743 = vadd.f32 %v656, %v742
    %v744 = vpop.f32.mrb[0].mxu0
    %745 = vmatprep.mubr.f32.mxu0 %v500
    %746 = vmatmul.mubr.f32.gmra.mrb[0].mxu0 %v499
    %v747 = vpop.f32.mrb[0].mxu0
    %v748 = vadd.f32 %v657, %v747
    %v749 = vpop.f32.mrb[0].mxu0
    %750 = vmatprep.mubr.f32.mxu0 %v502
    %751 = vmatmul.mubr.f32.gmra.mrb[0].mxu0 %v501
    %v752 = vpop.f32.mrb[0].mxu0
    %v753 = vadd.f32 %v658, %v752
    %v754 = vpop.f32.mrb[0].mxu0
    %755 = vmatprep.mubr.f32.mxu0 %v504
    %756 = vmatmul.mubr.f32.gmra.mrb[0].mxu0 %v503
    %v757 = vpop.f32.mrb[0].mxu0
    %v758 = vadd.f32 %v659, %v757
    %v759 = vpop.f32.mrb[0].mxu0
    %760 = vmatprep.mubr.f32.mxu0 %v506
    %761 = vmatmul.mubr.f32.gmra.mrb[0].mxu0 %v505
    %v762 = vpop.f32.mrb[0].mxu0
    %v763 = vadd.f32 %v660, %v762
    %v764 = vpop.f32.mrb[0].mxu0
    %765 = vmatprep.mubr.f32.mxu0 %v508
    %766 = vmatmul.mubr.f32.gmra.mrb[0].mxu0 %v507
    %v767 = vpop.f32.mrb[0].mxu0
    %v768 = vadd.f32 %v661, %v767
    %v769 = vpop.f32.mrb[0].mxu0
    %770 = vmatprep.mubr.f32.mxu0 %v510
    %771 = vmatmul.mubr.f32.gmra.mrb[0].mxu0 %v509
    %v772 = vpop.f32.mrb[0].mxu0
    %v773 = vadd.f32 %v662, %v772
    %v774 = vpop.f32.mrb[0].mxu0
    %775 = vmatprep.mubr.f32.mxu0 %v512
    %776 = vmatmul.mubr.f32.gmra.mrb[0].mxu0 %v511
    %v777 = vpop.f32.mrb[0].mxu0
    %v778 = vadd.f32 %v663, %v777
    %v779 = vpop.f32.mrb[0].mxu0
    %780 = vmatprep.mubr.f32.mxu0 %v514
    %781 = vmatmul.mubr.f32.gmra.mrb[0].mxu0 %v513
    %v782 = vpop.f32.mrb[0].mxu0
    %v783 = vadd.f32 %v664, %v782
    %v784 = vpop.f32.mrb[0].mxu0
    %785 = vmatprep.mubr.f32.mxu0 %v516
    %786 = vmatmul.mubr.f32.gmra.mrb[0].mxu0 %v515
    %v787 = vpop.f32.mrb[0].mxu0
    %v788 = vadd.f32 %v665, %v787
    %v789 = vpop.f32.mrb[0].mxu0
    %790 = vmatprep.mubr.f32.mxu0 %v518
    %791 = vmatmul.mubr.f32.gmra.mrb[0].mxu0 %v517
    %v792 = vpop.f32.mrb[0].mxu0
    %v793 = vadd.f32 %v666, %v792
    %v794 = vpop.f32.mrb[0].mxu0
    %795 = vmatprep.mubr.f32.mxu0 %v520
    %796 = vmatmul.mubr.f32.gmra.mrb[0].mxu0 %v519
    %v797 = vpop.f32.mrb[0].mxu0
    %v798 = vadd.f32 %v667, %v797
    %v799 = vpop.f32.mrb[0].mxu0
    %800 = vmatprep.mubr.f32.mxu0 %v522
    %801 = vmatmul.mubr.f32.gmra.mrb[0].mxu0 %v521
    %v802 = vpop.f32.mrb[0].mxu0
    %v803 = vadd.f32 %v668, %v802
    %v804 = vpop.f32.mrb[0].mxu0
    %805 = vmatprep.mubr.f32.mxu0 %v524
    %806 = vmatmul.mubr.f32.gmra.mrb[0].mxu0 %v523
    %v807 = vpop.f32.mrb[0].mxu0
    %v808 = vadd.f32 %v669, %v807
    %v809 = vpop.f32.mrb[0].mxu0
    %810 = vmatprep.mubr.f32.mxu0 %v526
    %811 = vmatmul.mubr.f32.gmra.mrb[0].mxu0 %v525
    %v812 = vpop.f32.mrb[0].mxu0
    %v813 = vadd.f32 %v670, %v812
    %v814 = vpop.f32.mrb[0].mxu0
    %815 = vdwg.mxu0
    %v816 = vld [vmem:[%s4] sm:$0x1]
    %v818 = vlaneseq
    %v819 = vshrl.u32 %v818, 7
    %v820 = vsub.s32 0, %v819
    %v821 = vrot.slane %v816, %v820
    %v823 = vadd.f32 %v738, %v821
    %v824 = vadd.f32 %v743, %v821
    %v825 = vadd.f32 %v748, %v821
    %v826 = vadd.f32 %v753, %v821
    %v827 = vadd.f32 %v758, %v821
    %v828 = vadd.f32 %v763, %v821
    %v829 = vadd.f32 %v768, %v821
    %v830 = vadd.f32 %v773, %v821
    %v831 = vadd.f32 %v778, %v821
    %v832 = vadd.f32 %v783, %v821
    %v833 = vadd.f32 %v788, %v821
    %v834 = vadd.f32 %v793, %v821
    %v835 = vadd.f32 %v798, %v821
    %v836 = vadd.f32 %v803, %v821
    %v837 = vadd.f32 %v808, %v821
    %v838 = vadd.f32 %v813, %v821
    %v839 = vmax.f32 %v823, 0.0
    %v840 = vmax.f32 %v824, 0.0
    %v841 = vmax.f32 %v825, 0.0
    %v842 = vmax.f32 %v826, 0.0
    %v843 = vmax.f32 %v827, 0.0
    %v844 = vmax.f32 %v828, 0.0
    %v845 = vmax.f32 %v829, 0.0
    %v846 = vmax.f32 %v830, 0.0
    %v847 = vmax.f32 %v831, 0.0
    %v848 = vmax.f32 %v832, 0.0
    %v849 = vmax.f32 %v833, 0.0
    %v850 = vmax.f32 %v834, 0.0
    %v851 = vmax.f32 %v835, 0.0
    %v852 = vmax.f32 %v836, 0.0
    %v853 = vmax.f32 %v837, 0.0
    %v854 = vmax.f32 %v838, 0.0
    %855 = vst [vmem:[%s5] sm:$0xff] %v839
    %856 = vst [vmem:[%s5 + $0x8] sm:$0xff] %v840
    %857 = vst [vmem:[%s5 + $0x10] sm:$0xff] %v841
    %858 = vst [vmem:[%s5 + $0x18] sm:$0xff] %v842
    %859 = vst [vmem:[%s5 + $0x20] sm:$0xff] %v843
    %860 = vst [vmem:[%s5 + $0x28] sm:$0xff] %v844
    %861 = vst [vmem:[%s5 + $0x30] sm:$0xff] %v845
    %862 = vst [vmem:[%s5 + $0x38] sm:$0xff] %v846
    %863 = vst [vmem:[%s5 + $0x40] sm:$0xff] %v847
    %864 = vst [vmem:[%s5 + $0x48] sm:$0xff] %v848
    %865 = vst [vmem:[%s5 + $0x50] sm:$0xff] %v849
    %866 = vst [vmem:[%s5 + $0x58] sm:$0xff] %v850
    %867 = vst [vmem:[%s5 + $0x60] sm:$0xff] %v851
    %868 = vst [vmem:[%s5 + $0x68] sm:$0xff] %v852
    %869 = vst [vmem:[%s5 + $0x70] sm:$0xff] %v853
    %870 = vst [vmem:[%s5 + $0x78] sm:$0xff] %v854
  $region29: #{sage_forward.2} parent=0 // pred_fallthru
    _
  // Predicated region
  $region30: #{sage_forward.2} parent=0 // pred_check
    _
  $region31: #{sage_forward.2} parent=0 // pred_check_branch
    %872 = sbr.rel (0) target = $region33
  $region32: #{sage_forward.2} parent=0 // pred_region
    _
  $region33: #{sage_forward.2} parent=0 // pred_fallthru
    _
  // Predicated region
  $region34: #{sage_forward.2} parent=0 // pred_check
    _
  $region35: #{sage_forward.2} parent=0 // pred_check_branch
    %874 = sbr.rel (0) target = $region37
  $region36: #{sage_forward.2} parent=0 // pred_region
    _
  $region37: #{sage_forward.2} parent=0 // pred_fallthru
    _

</llo_original>
